<compile_context>
chip_gen: v6e
topology: v6e:2x2x1
jax: 0.10.0
libtpu: 0.0.40
codegen_flags: <defaults>
</compile_context>

<pallas_src>
import math

import numpy as np

import jax
import jax.numpy as jnp
from jax.experimental import pallas as pl
from jax.experimental.pallas import tpu as pltpu


def _round_up(x, m):
    return (x + m - 1) // m * m


def _make_kernel(Ho, Wo, Cin_p, Cout_p, stride, L):
    """Kernel factory; all configuration is static (closed over).

    Layout: flattened conv-OUTPUT spatial (Ho*Wo, zero-padded to L lanes) on the
    128-lane axis, channels on sublanes.  Taps are rebuilt on-chip with XLU lane
    rolls + iota-derived boundary masks and written into VMEM im2col scratches,
    so each conv is a single fused-K MXU matmul.
    """

    def _lane_roll(v, off):
        # result[q] = v[(q + off) mod L]   (tap source index = q + off)
        s = (-off) % L
        if s == 0:
            return v
        return pltpu.roll(v, s, axis=1)     # XLU lane rotation (np.roll semantics)

    def kernel(pos_ref, x_ref, w1_ref, w2_ref, out_ref, col1_ref, col2_ref):
        cd = col1_ref.dtype
        row = pos_ref[0:1, :]               # (1, L) int32: output-row index of lane
        col = pos_ref[1:2, :]               # (1, L) int32: output-col index of lane
        row_ok = row < Ho                   # also zeroes the padded lanes >= Ho*Wo

        def s1_mask(dy, dx):                # stride-1 tap in-bounds mask on (Ho, Wo)
            return ((row + dy >= 0) & (row + dy < Ho) &
                    (col + dx >= 0) & (col + dx < Wo) & row_ok)

        masks_s1 = [s1_mask(t // 3 - 1, t % 3 - 1) for t in range(9)]

        # ---- conv1 im2col: taps built directly at OUTPUT resolution -----------
        # roll/select kept in f32, single cast at the col store (matmul operands
        # are still `cd`); friendlier to the bf16-less v5e VPU.
        if stride == 1:
            x0 = x_ref[0].astype(jnp.float32)                     # (Cin_p, L)
            for t in range(9):
                dy, dx = t // 3 - 1, t % 3 - 1
                tap = _lane_roll(x0, dy * Wo + dx)
                col1_ref[t * Cin_p:(t + 1) * Cin_p, :] = (
                    jnp.where(masks_s1[t], tap, 0.0).astype(cd))
            x_sc = x0                                             # shortcut channels
        else:  # stride == 2: four input parity blocks, shifts are only 0/1 row/col
            par = [x_ref[0, p * Cin_p:(p + 1) * Cin_p, :].astype(jnp.float32)
                   for p in range(4)]
            for t in range(9):
                dy, dx = t // 3 - 1, t % 3 - 1
                p = 2 * int(dy != 0) + int(dx != 0)     # which parity block
                sa, sb = int(dy == -1), int(dx == -1)   # shift one row / one col
                tap = _lane_roll(par[p], -(sa * Wo + sb))
                ok = (row >= sa) & (col >= sb) & row_ok
                col1_ref[t * Cin_p:(t + 1) * Cin_p, :] = (
                    jnp.where(ok, tap, 0.0).astype(cd))
            x_sc = par[0]      # (even, even) block == stride-2 1x1-shortcut input

        # Shortcut channels fused into conv2's K (matching columns in w2_big).
        col2_ref[9 * Cout_p:9 * Cout_p + Cin_p, :] = x_sc.astype(cd)

        # ---- conv1: ONE fused-K MXU matmul (K = 9*Cin_p), f32 accum, ReLU -----
        h = jnp.dot(w1_ref[...], col1_ref[...],
                    preferred_element_type=jnp.float32)           # (Cout_p, L)
        h = jnp.maximum(h, 0.0)

        # ---- conv2 im2col on the (Ho, Wo) grid ---------------------------------
        for t in range(9):
            dy, dx = t // 3 - 1, t % 3 - 1
            tap = _lane_roll(h, dy * Wo + dx)
            col2_ref[t * Cout_p:(t + 1) * Cout_p, :] = (
                jnp.where(masks_s1[t], tap, 0.0).astype(cd))

        # ---- conv2 + fused shortcut: ONE matmul (K = 9*Cout_p + Cin_p), ReLU --
        out = jnp.dot(w2_ref[...], col2_ref[...],
                      preferred_element_type=jnp.float32)         # (Cout_p, L)
        out_ref[...] = jnp.maximum(out, 0.0)[None].astype(out_ref.dtype)

    return kernel


def terrain_net_block(x_nchw, w1_hwio, w2_hwio, ws=None, stride=1,
                      compute_dtype=jnp.bfloat16):
    """Pallas implementation of TerrainNetBlock.forward (NCHW in, NCHW out).

    x_nchw : (N, Cin, H, W)        input (PyTorch layout)
    w1_hwio: (3, 3, Cin, Cout)     conv1 weight, HWIO
    w2_hwio: (3, 3, Cout, Cout)    conv2 weight, HWIO
    ws     : (Cin, Cout) or None   1x1 shortcut weight (None => identity shortcut)
    compute_dtype: MXU operand dtype (bf16 default: big matmul-throughput and
                   traffic win on v6e/v7x); accumulation is always f32 and the
                   output keeps x_nchw.dtype.
    """
    if stride not in (1, 2):
        raise NotImplementedError("TerrainNetBlock kernel supports stride 1 or 2")
    N, Cin, H, W = x_nchw.shape
    Cout = w1_hwio.shape[-1]
    Ho = (H - 1) // stride + 1
    Wo = (W - 1) // stride + 1
    has_shortcut = (stride != 1) or (Cin != Cout)

    cd = jnp.dtype(compute_dtype)
    assert cd.itemsize in (2, 4), "compute_dtype must be a 16- or 32-bit float"
    gran = 8 * (4 // cd.itemsize)               # sublane granule: 8 (f32) / 16 (bf16)
    Cin_p, Cout_p = _round_up(Cin, gran), _round_up(Cout, gran)
    L = _round_up(Ho * Wo, 128)                 # lane-dense flattened output spatial
    nblk = 1 if stride == 1 else 4

    # ---- input: channel rows padded to the sublane granule, spatial flattened
    # and zero-padded to L lanes.  For stride 2 the image is split into its 4
    # row/col parity blocks (pure relayout, 1x HBM traffic) so all 9 conv1 taps
    # become 0/1-lane rolls at output resolution -- no selector matmul.
    if stride == 1:
        xin = jnp.zeros((N, Cin_p, L), cd)
        xin = xin.at[:, :Cin, :H * W].set(x_nchw.reshape(N, Cin, H * W).astype(cd))
    else:
        He, We = H + (H % 2), W + (W % 2)       # pad to even => parity blocks are (Ho, Wo)
        xpad = jnp.zeros((N, Cin, He, We), cd)
        xpad = xpad.at[:, :, :H, :W].set(x_nchw.astype(cd))
        xin = jnp.zeros((N, 4 * Cin_p, L), cd)
        for p, (a, b) in enumerate(((0, 0), (0, 1), (1, 0), (1, 1))):
            blk = xpad[:, :, a::2, b::2].reshape(N, Cin, Ho * Wo)
            xin = xin.at[:, p * Cin_p:p * Cin_p + Cin, :Ho * Wo].set(blk)

    # ---- weights: tap-major K with zero-padded channel slots; the (strided) 1x1
    # shortcut (or an identity block) is concatenated onto conv2's K so the
    # shortcut + residual add ride the same MXU matmul.
    w1t = jnp.zeros((Cout_p, 3, 3, Cin_p), cd)
    w1t = w1t.at[:Cout, :, :, :Cin].set(jnp.transpose(w1_hwio, (3, 0, 1, 2)).astype(cd))
    w1r = w1t.reshape(Cout_p, 9 * Cin_p)

    w2t = jnp.zeros((Cout_p, 3, 3, Cout_p), cd)
    w2t = w2t.at[:Cout, :, :, :Cout].set(jnp.transpose(w2_hwio, (3, 0, 1, 2)).astype(cd))
    if has_shortcut:
        assert ws is not None and ws.shape == (Cin, Cout), "need (Cin, Cout) shortcut weight"
        ws_eff = jnp.transpose(ws).astype(cd)           # (Cout, Cin)
    else:
        ws_eff = jnp.eye(Cout, dtype=cd)                # identity shortcut, fused too
    wsp = jnp.zeros((Cout_p, Cin_p), cd).at[:Cout, :Cin].set(ws_eff)
    w2r = jnp.concatenate([w2t.reshape(Cout_p, 9 * Cout_p), wsp], axis=1)

    # ---- tiny (2, L) int32 row/col index table (replaces the old 9x(HW+HoWo)
    # border-mask inputs; per-tap masks are rebuilt in-kernel from comparisons).
    q = np.arange(L)
    pos = jnp.asarray(np.stack([q // Wo, q % Wo]).astype(np.int32))

    kernel = _make_kernel(Ho, Wo, Cin_p, Cout_p, stride, L)

    # ---- explicit VMEM budget (v5e scoped default is only 16 MiB) --------------
    itm = cd.itemsize
    est = (2 * nblk * Cin_p * L * itm                       # x block (double-buffered)
           + 2 * Cout_p * L * x_nchw.dtype.itemsize         # out block
           + 2 * (Cout_p * 9 * Cin_p + Cout_p * (9 * Cout_p + Cin_p)) * itm
           + 2 * 8 * L * 4                                  # pos table
           + (9 * Cin_p + 9 * Cout_p + Cin_p) * L * itm)    # im2col scratches
    vmem_limit = int(min(64 << 20, max(16 << 20, 2 * est)))

    out = pl.pallas_call(
        kernel,
        out_shape=jax.ShapeDtypeStruct((N, Cout_p, L), x_nchw.dtype),
        grid_spec=pltpu.PrefetchScalarGridSpec(
            num_scalar_prefetch=0,
            grid=(N,),   # one image per step; "parallel" => 2-way TC split on v7x
            in_specs=[
                pl.BlockSpec((2, L), lambda n: (0, 0)),                    # pos
                pl.BlockSpec((1, nblk * Cin_p, L), lambda n: (n, 0, 0)),   # x (flat/parity)
                pl.BlockSpec((Cout_p, 9 * Cin_p), lambda n: (0, 0)),       # w1
                pl.BlockSpec((Cout_p, 9 * Cout_p + Cin_p), lambda n: (0, 0)),  # w2+shortcut
            ],
            out_specs=pl.BlockSpec((1, Cout_p, L), lambda n: (n, 0, 0)),
            scratch_shapes=[
                pltpu.VMEM((9 * Cin_p, L), cd),               # conv1 im2col (fused K)
                pltpu.VMEM((9 * Cout_p + Cin_p, L), cd),      # conv2 im2col + shortcut rows
            ],
        ),
        compiler_params=pltpu.CompilerParams(
            dimension_semantics=("parallel",),
            vmem_limit_bytes=vmem_limit,
        ),
    )(pos, xin, w1r, w2r)

    # strip channel/lane padding; reshape back to NCHW spatial (free reshapes).
    return out[:, :Cout, :Ho * Wo].reshape(N, Cout, Ho, Wo)


def _reference_block(x_nchw, w1_hwio, w2_hwio, ws, stride, has_shortcut):
    """Pure-JAX reference (lax convs) mirroring the PyTorch forward."""
    dn = ("NHWC", "HWIO", "NHWC")
    hp = jax.lax.Precision.HIGHEST
    x = jnp.transpose(x_nchw, (0, 2, 3, 1))
    h = jax.lax.conv_general_dilated(x, w1_hwio, (stride, stride), ((1, 1), (1, 1)),
                                     dimension_numbers=dn, precision=hp)
    h = jnp.maximum(h, 0.0)
    out = jax.lax.conv_general_dilated(h, w2_hwio, (1, 1), ((1, 1), (1, 1)),
                                       dimension_numbers=dn, precision=hp)
    if has_shortcut:
        sc = jax.lax.conv_general_dilated(x, ws.reshape(1, 1, *ws.shape),
                                          (stride, stride), "VALID",
                                          dimension_numbers=dn, precision=hp)
    else:
        sc = x
    out = jnp.maximum(out + sc, 0.0)
    return jnp.transpose(out, (0, 3, 1, 2))


if __name__ == "__main__":
    key = jax.random.PRNGKey(0)
    N, H, W = 2, 16, 16
    # (Cin, Cout, stride, compute_dtype, atol, rtol)
    # Tolerances are set to be robust to MXU matmul precision-mode differences
    # between the XLA conv reference and the Pallas matmuls across generations
    # while still catching any structural (tap/mask/layout) error.
    configs = [
        (4, 8, 1, jnp.float32, 1e-2, 1e-2),    # channel change  -> 1x1 shortcut (fused)
        (8, 8, 2, jnp.float32, 1e-2, 1e-2),    # stride 2        -> parity-split conv1
        (8, 8, 1, jnp.float32, 1e-2, 1e-2),    # identity shortcut (fused as I block)
        (8, 8, 2, jnp.bfloat16, 1e-1, 5e-2),   # bf16 MXU operand path (v6e/v7x default)
    ]

    for cin, cout, stride, cd, atol, rtol in configs:
        key, k1, k2, k3, k4 = jax.random.split(key, 5)
        x = jax.random.normal(k1, (N, cin, H, W), jnp.float32)
        w1 = jax.random.normal(k2, (3, 3, cin, cout), jnp.float32) / (3.0 * math.sqrt(cin))
        w2 = jax.random.normal(k3, (3, 3, cout, cout), jnp.float32) / (3.0 * math.sqrt(cout))
        has_sc = (stride != 1) or (cin != cout)
        ws = (jax.random.normal(k4, (cin, cout), jnp.float32) / math.sqrt(cin)
              if has_sc else None)

        y = jax.block_until_ready(
            terrain_net_block(x, w1, w2, ws, stride=stride, compute_dtype=cd))
        y_ref = _reference_block(x, w1, w2, ws, stride, has_sc)
        assert y.shape == y_ref.shape, (y.shape, y_ref.shape)
        max_err = float(jnp.max(jnp.abs(y - y_ref)))
        assert jnp.allclose(y, y_ref, atol=atol, rtol=rtol), (
            f"mismatch for cin={cin} cout={cout} stride={stride} "
            f"compute_dtype={jnp.dtype(cd).name}: max abs err {max_err}")

    print("KERNEL_OK")
</pallas_src>

<mosaic_0001>
module attributes {stable_mosaic.version = 11 : i64} {
  func.func @kernel(%arg0: i32, %arg1: memref<2x256xi32, #tpu.memory_space<vmem>>, %arg2: memref<1x8x256xf32, #tpu.memory_space<vmem>>, %arg3: memref<8x72xf32, #tpu.memory_space<vmem>>, %arg4: memref<8x80xf32, #tpu.memory_space<vmem>>, %arg5: memref<1x8x256xf32, #tpu.memory_space<vmem>>, %arg6: memref<72x256xf32, #tpu.memory_space<vmem>>, %arg7: memref<80x256xf32, #tpu.memory_space<vmem>>) attributes {dimension_semantics = [#tpu.dimension_semantics<parallel>], iteration_bounds = array<i64: 2>, scalar_prefetch = 0 : i64, scratch_operands = 2 : i64, tpu.core_type = #tpu.core_type<tc>, window_params = [{pipeline_mode = #tpu.pipeline_mode<synchronous>, transform_indices = @transform_0, window_bounds = array<i64: 2, 256>}, {transform_indices = @transform_1, window_bounds = array<i64: 1, 8, 256>}, {pipeline_mode = #tpu.pipeline_mode<synchronous>, transform_indices = @transform_2, window_bounds = array<i64: 8, 72>}, {pipeline_mode = #tpu.pipeline_mode<synchronous>, transform_indices = @transform_3, window_bounds = array<i64: 8, 80>}, {transform_indices = @transform_4, window_bounds = array<i64: 1, 8, 256>}]} {
    %c0 = arith.constant 0 : index
    %c0_0 = arith.constant 0 : index
    %0 = vector.load %arg1[%c0, %c0_0] : memref<2x256xi32, #tpu.memory_space<vmem>>, vector<1x256xi32>
    %c1 = arith.constant 1 : index
    %c0_1 = arith.constant 0 : index
    %1 = vector.load %arg1[%c1, %c0_1] : memref<2x256xi32, #tpu.memory_space<vmem>>, vector<1x256xi32>
    %c16_i32 = arith.constant 16 : i32
    %2 = vector.broadcast %c16_i32 : i32 to vector<1x256xi32>
    %3 = arith.cmpi slt, %0, %2 : vector<1x256xi32>
    %c-1_i32 = arith.constant -1 : i32
    %4 = vector.broadcast %c-1_i32 : i32 to vector<1x256xi32>
    %5 = arith.addi %0, %4 : vector<1x256xi32>
    %c0_i32 = arith.constant 0 : i32
    %6 = vector.broadcast %c0_i32 : i32 to vector<1x256xi32>
    %7 = arith.cmpi sge, %5, %6 : vector<1x256xi32>
    %c-1_i32_2 = arith.constant -1 : i32
    %8 = vector.broadcast %c-1_i32_2 : i32 to vector<1x256xi32>
    %9 = arith.addi %0, %8 : vector<1x256xi32>
    %c16_i32_3 = arith.constant 16 : i32
    %10 = vector.broadcast %c16_i32_3 : i32 to vector<1x256xi32>
    %11 = arith.cmpi slt, %9, %10 : vector<1x256xi32>
    %12 = arith.andi %7, %11 : vector<1x256xi1>
    %c-1_i32_4 = arith.constant -1 : i32
    %13 = vector.broadcast %c-1_i32_4 : i32 to vector<1x256xi32>
    %14 = arith.addi %1, %13 : vector<1x256xi32>
    %c0_i32_5 = arith.constant 0 : i32
    %15 = vector.broadcast %c0_i32_5 : i32 to vector<1x256xi32>
    %16 = arith.cmpi sge, %14, %15 : vector<1x256xi32>
    %17 = arith.andi %12, %16 : vector<1x256xi1>
    %c-1_i32_6 = arith.constant -1 : i32
    %18 = vector.broadcast %c-1_i32_6 : i32 to vector<1x256xi32>
    %19 = arith.addi %1, %18 : vector<1x256xi32>
    %c16_i32_7 = arith.constant 16 : i32
    %20 = vector.broadcast %c16_i32_7 : i32 to vector<1x256xi32>
    %21 = arith.cmpi slt, %19, %20 : vector<1x256xi32>
    %22 = arith.andi %17, %21 : vector<1x256xi1>
    %23 = arith.andi %22, %3 : vector<1x256xi1>
    %c-1_i32_8 = arith.constant -1 : i32
    %24 = vector.broadcast %c-1_i32_8 : i32 to vector<1x256xi32>
    %25 = arith.addi %0, %24 : vector<1x256xi32>
    %c0_i32_9 = arith.constant 0 : i32
    %26 = vector.broadcast %c0_i32_9 : i32 to vector<1x256xi32>
    %27 = arith.cmpi sge, %25, %26 : vector<1x256xi32>
    %c-1_i32_10 = arith.constant -1 : i32
    %28 = vector.broadcast %c-1_i32_10 : i32 to vector<1x256xi32>
    %29 = arith.addi %0, %28 : vector<1x256xi32>
    %c16_i32_11 = arith.constant 16 : i32
    %30 = vector.broadcast %c16_i32_11 : i32 to vector<1x256xi32>
    %31 = arith.cmpi slt, %29, %30 : vector<1x256xi32>
    %32 = arith.andi %27, %31 : vector<1x256xi1>
    %c0_i32_12 = arith.constant 0 : i32
    %33 = vector.broadcast %c0_i32_12 : i32 to vector<1x256xi32>
    %34 = arith.addi %1, %33 : vector<1x256xi32>
    %c0_i32_13 = arith.constant 0 : i32
    %35 = vector.broadcast %c0_i32_13 : i32 to vector<1x256xi32>
    %36 = arith.cmpi sge, %34, %35 : vector<1x256xi32>
    %37 = arith.andi %32, %36 : vector<1x256xi1>
    %c0_i32_14 = arith.constant 0 : i32
    %38 = vector.broadcast %c0_i32_14 : i32 to vector<1x256xi32>
    %39 = arith.addi %1, %38 : vector<1x256xi32>
    %c16_i32_15 = arith.constant 16 : i32
    %40 = vector.broadcast %c16_i32_15 : i32 to vector<1x256xi32>
    %41 = arith.cmpi slt, %39, %40 : vector<1x256xi32>
    %42 = arith.andi %37, %41 : vector<1x256xi1>
    %43 = arith.andi %42, %3 : vector<1x256xi1>
    %c-1_i32_16 = arith.constant -1 : i32
    %44 = vector.broadcast %c-1_i32_16 : i32 to vector<1x256xi32>
    %45 = arith.addi %0, %44 : vector<1x256xi32>
    %c0_i32_17 = arith.constant 0 : i32
    %46 = vector.broadcast %c0_i32_17 : i32 to vector<1x256xi32>
    %47 = arith.cmpi sge, %45, %46 : vector<1x256xi32>
    %c-1_i32_18 = arith.constant -1 : i32
    %48 = vector.broadcast %c-1_i32_18 : i32 to vector<1x256xi32>
    %49 = arith.addi %0, %48 : vector<1x256xi32>
    %c16_i32_19 = arith.constant 16 : i32
    %50 = vector.broadcast %c16_i32_19 : i32 to vector<1x256xi32>
    %51 = arith.cmpi slt, %49, %50 : vector<1x256xi32>
    %52 = arith.andi %47, %51 : vector<1x256xi1>
    %c1_i32 = arith.constant 1 : i32
    %53 = vector.broadcast %c1_i32 : i32 to vector<1x256xi32>
    %54 = arith.addi %1, %53 : vector<1x256xi32>
    %c0_i32_20 = arith.constant 0 : i32
    %55 = vector.broadcast %c0_i32_20 : i32 to vector<1x256xi32>
    %56 = arith.cmpi sge, %54, %55 : vector<1x256xi32>
    %57 = arith.andi %52, %56 : vector<1x256xi1>
    %c1_i32_21 = arith.constant 1 : i32
    %58 = vector.broadcast %c1_i32_21 : i32 to vector<1x256xi32>
    %59 = arith.addi %1, %58 : vector<1x256xi32>
    %c16_i32_22 = arith.constant 16 : i32
    %60 = vector.broadcast %c16_i32_22 : i32 to vector<1x256xi32>
    %61 = arith.cmpi slt, %59, %60 : vector<1x256xi32>
    %62 = arith.andi %57, %61 : vector<1x256xi1>
    %63 = arith.andi %62, %3 : vector<1x256xi1>
    %c0_i32_23 = arith.constant 0 : i32
    %64 = vector.broadcast %c0_i32_23 : i32 to vector<1x256xi32>
    %65 = arith.addi %0, %64 : vector<1x256xi32>
    %c0_i32_24 = arith.constant 0 : i32
    %66 = vector.broadcast %c0_i32_24 : i32 to vector<1x256xi32>
    %67 = arith.cmpi sge, %65, %66 : vector<1x256xi32>
    %c0_i32_25 = arith.constant 0 : i32
    %68 = vector.broadcast %c0_i32_25 : i32 to vector<1x256xi32>
    %69 = arith.addi %0, %68 : vector<1x256xi32>
    %c16_i32_26 = arith.constant 16 : i32
    %70 = vector.broadcast %c16_i32_26 : i32 to vector<1x256xi32>
    %71 = arith.cmpi slt, %69, %70 : vector<1x256xi32>
    %72 = arith.andi %67, %71 : vector<1x256xi1>
    %c-1_i32_27 = arith.constant -1 : i32
    %73 = vector.broadcast %c-1_i32_27 : i32 to vector<1x256xi32>
    %74 = arith.addi %1, %73 : vector<1x256xi32>
    %c0_i32_28 = arith.constant 0 : i32
    %75 = vector.broadcast %c0_i32_28 : i32 to vector<1x256xi32>
    %76 = arith.cmpi sge, %74, %75 : vector<1x256xi32>
    %77 = arith.andi %72, %76 : vector<1x256xi1>
    %c-1_i32_29 = arith.constant -1 : i32
    %78 = vector.broadcast %c-1_i32_29 : i32 to vector<1x256xi32>
    %79 = arith.addi %1, %78 : vector<1x256xi32>
    %c16_i32_30 = arith.constant 16 : i32
    %80 = vector.broadcast %c16_i32_30 : i32 to vector<1x256xi32>
    %81 = arith.cmpi slt, %79, %80 : vector<1x256xi32>
    %82 = arith.andi %77, %81 : vector<1x256xi1>
    %83 = arith.andi %82, %3 : vector<1x256xi1>
    %c0_i32_31 = arith.constant 0 : i32
    %84 = vector.broadcast %c0_i32_31 : i32 to vector<1x256xi32>
    %85 = arith.addi %0, %84 : vector<1x256xi32>
    %c0_i32_32 = arith.constant 0 : i32
    %86 = vector.broadcast %c0_i32_32 : i32 to vector<1x256xi32>
    %87 = arith.cmpi sge, %85, %86 : vector<1x256xi32>
    %c0_i32_33 = arith.constant 0 : i32
    %88 = vector.broadcast %c0_i32_33 : i32 to vector<1x256xi32>
    %89 = arith.addi %0, %88 : vector<1x256xi32>
    %c16_i32_34 = arith.constant 16 : i32
    %90 = vector.broadcast %c16_i32_34 : i32 to vector<1x256xi32>
    %91 = arith.cmpi slt, %89, %90 : vector<1x256xi32>
    %92 = arith.andi %87, %91 : vector<1x256xi1>
    %c0_i32_35 = arith.constant 0 : i32
    %93 = vector.broadcast %c0_i32_35 : i32 to vector<1x256xi32>
    %94 = arith.addi %1, %93 : vector<1x256xi32>
    %c0_i32_36 = arith.constant 0 : i32
    %95 = vector.broadcast %c0_i32_36 : i32 to vector<1x256xi32>
    %96 = arith.cmpi sge, %94, %95 : vector<1x256xi32>
    %97 = arith.andi %92, %96 : vector<1x256xi1>
    %c0_i32_37 = arith.constant 0 : i32
    %98 = vector.broadcast %c0_i32_37 : i32 to vector<1x256xi32>
    %99 = arith.addi %1, %98 : vector<1x256xi32>
    %c16_i32_38 = arith.constant 16 : i32
    %100 = vector.broadcast %c16_i32_38 : i32 to vector<1x256xi32>
    %101 = arith.cmpi slt, %99, %100 : vector<1x256xi32>
    %102 = arith.andi %97, %101 : vector<1x256xi1>
    %103 = arith.andi %102, %3 : vector<1x256xi1>
    %c0_i32_39 = arith.constant 0 : i32
    %104 = vector.broadcast %c0_i32_39 : i32 to vector<1x256xi32>
    %105 = arith.addi %0, %104 : vector<1x256xi32>
    %c0_i32_40 = arith.constant 0 : i32
    %106 = vector.broadcast %c0_i32_40 : i32 to vector<1x256xi32>
    %107 = arith.cmpi sge, %105, %106 : vector<1x256xi32>
    %c0_i32_41 = arith.constant 0 : i32
    %108 = vector.broadcast %c0_i32_41 : i32 to vector<1x256xi32>
    %109 = arith.addi %0, %108 : vector<1x256xi32>
    %c16_i32_42 = arith.constant 16 : i32
    %110 = vector.broadcast %c16_i32_42 : i32 to vector<1x256xi32>
    %111 = arith.cmpi slt, %109, %110 : vector<1x256xi32>
    %112 = arith.andi %107, %111 : vector<1x256xi1>
    %c1_i32_43 = arith.constant 1 : i32
    %113 = vector.broadcast %c1_i32_43 : i32 to vector<1x256xi32>
    %114 = arith.addi %1, %113 : vector<1x256xi32>
    %c0_i32_44 = arith.constant 0 : i32
    %115 = vector.broadcast %c0_i32_44 : i32 to vector<1x256xi32>
    %116 = arith.cmpi sge, %114, %115 : vector<1x256xi32>
    %117 = arith.andi %112, %116 : vector<1x256xi1>
    %c1_i32_45 = arith.constant 1 : i32
    %118 = vector.broadcast %c1_i32_45 : i32 to vector<1x256xi32>
    %119 = arith.addi %1, %118 : vector<1x256xi32>
    %c16_i32_46 = arith.constant 16 : i32
    %120 = vector.broadcast %c16_i32_46 : i32 to vector<1x256xi32>
    %121 = arith.cmpi slt, %119, %120 : vector<1x256xi32>
    %122 = arith.andi %117, %121 : vector<1x256xi1>
    %123 = arith.andi %122, %3 : vector<1x256xi1>
    %c1_i32_47 = arith.constant 1 : i32
    %124 = vector.broadcast %c1_i32_47 : i32 to vector<1x256xi32>
    %125 = arith.addi %0, %124 : vector<1x256xi32>
    %c0_i32_48 = arith.constant 0 : i32
    %126 = vector.broadcast %c0_i32_48 : i32 to vector<1x256xi32>
    %127 = arith.cmpi sge, %125, %126 : vector<1x256xi32>
    %c1_i32_49 = arith.constant 1 : i32
    %128 = vector.broadcast %c1_i32_49 : i32 to vector<1x256xi32>
    %129 = arith.addi %0, %128 : vector<1x256xi32>
    %c16_i32_50 = arith.constant 16 : i32
    %130 = vector.broadcast %c16_i32_50 : i32 to vector<1x256xi32>
    %131 = arith.cmpi slt, %129, %130 : vector<1x256xi32>
    %132 = arith.andi %127, %131 : vector<1x256xi1>
    %c-1_i32_51 = arith.constant -1 : i32
    %133 = vector.broadcast %c-1_i32_51 : i32 to vector<1x256xi32>
    %134 = arith.addi %1, %133 : vector<1x256xi32>
    %c0_i32_52 = arith.constant 0 : i32
    %135 = vector.broadcast %c0_i32_52 : i32 to vector<1x256xi32>
    %136 = arith.cmpi sge, %134, %135 : vector<1x256xi32>
    %137 = arith.andi %132, %136 : vector<1x256xi1>
    %c-1_i32_53 = arith.constant -1 : i32
    %138 = vector.broadcast %c-1_i32_53 : i32 to vector<1x256xi32>
    %139 = arith.addi %1, %138 : vector<1x256xi32>
    %c16_i32_54 = arith.constant 16 : i32
    %140 = vector.broadcast %c16_i32_54 : i32 to vector<1x256xi32>
    %141 = arith.cmpi slt, %139, %140 : vector<1x256xi32>
    %142 = arith.andi %137, %141 : vector<1x256xi1>
    %143 = arith.andi %142, %3 : vector<1x256xi1>
    %c1_i32_55 = arith.constant 1 : i32
    %144 = vector.broadcast %c1_i32_55 : i32 to vector<1x256xi32>
    %145 = arith.addi %0, %144 : vector<1x256xi32>
    %c0_i32_56 = arith.constant 0 : i32
    %146 = vector.broadcast %c0_i32_56 : i32 to vector<1x256xi32>
    %147 = arith.cmpi sge, %145, %146 : vector<1x256xi32>
    %c1_i32_57 = arith.constant 1 : i32
    %148 = vector.broadcast %c1_i32_57 : i32 to vector<1x256xi32>
    %149 = arith.addi %0, %148 : vector<1x256xi32>
    %c16_i32_58 = arith.constant 16 : i32
    %150 = vector.broadcast %c16_i32_58 : i32 to vector<1x256xi32>
    %151 = arith.cmpi slt, %149, %150 : vector<1x256xi32>
    %152 = arith.andi %147, %151 : vector<1x256xi1>
    %c0_i32_59 = arith.constant 0 : i32
    %153 = vector.broadcast %c0_i32_59 : i32 to vector<1x256xi32>
    %154 = arith.addi %1, %153 : vector<1x256xi32>
    %c0_i32_60 = arith.constant 0 : i32
    %155 = vector.broadcast %c0_i32_60 : i32 to vector<1x256xi32>
    %156 = arith.cmpi sge, %154, %155 : vector<1x256xi32>
    %157 = arith.andi %152, %156 : vector<1x256xi1>
    %c0_i32_61 = arith.constant 0 : i32
    %158 = vector.broadcast %c0_i32_61 : i32 to vector<1x256xi32>
    %159 = arith.addi %1, %158 : vector<1x256xi32>
    %c16_i32_62 = arith.constant 16 : i32
    %160 = vector.broadcast %c16_i32_62 : i32 to vector<1x256xi32>
    %161 = arith.cmpi slt, %159, %160 : vector<1x256xi32>
    %162 = arith.andi %157, %161 : vector<1x256xi1>
    %163 = arith.andi %162, %3 : vector<1x256xi1>
    %c1_i32_63 = arith.constant 1 : i32
    %164 = vector.broadcast %c1_i32_63 : i32 to vector<1x256xi32>
    %165 = arith.addi %0, %164 : vector<1x256xi32>
    %c0_i32_64 = arith.constant 0 : i32
    %166 = vector.broadcast %c0_i32_64 : i32 to vector<1x256xi32>
    %167 = arith.cmpi sge, %165, %166 : vector<1x256xi32>
    %c1_i32_65 = arith.constant 1 : i32
    %168 = vector.broadcast %c1_i32_65 : i32 to vector<1x256xi32>
    %169 = arith.addi %0, %168 : vector<1x256xi32>
    %c16_i32_66 = arith.constant 16 : i32
    %170 = vector.broadcast %c16_i32_66 : i32 to vector<1x256xi32>
    %171 = arith.cmpi slt, %169, %170 : vector<1x256xi32>
    %172 = arith.andi %167, %171 : vector<1x256xi1>
    %c1_i32_67 = arith.constant 1 : i32
    %173 = vector.broadcast %c1_i32_67 : i32 to vector<1x256xi32>
    %174 = arith.addi %1, %173 : vector<1x256xi32>
    %c0_i32_68 = arith.constant 0 : i32
    %175 = vector.broadcast %c0_i32_68 : i32 to vector<1x256xi32>
    %176 = arith.cmpi sge, %174, %175 : vector<1x256xi32>
    %177 = arith.andi %172, %176 : vector<1x256xi1>
    %c1_i32_69 = arith.constant 1 : i32
    %178 = vector.broadcast %c1_i32_69 : i32 to vector<1x256xi32>
    %179 = arith.addi %1, %178 : vector<1x256xi32>
    %c16_i32_70 = arith.constant 16 : i32
    %180 = vector.broadcast %c16_i32_70 : i32 to vector<1x256xi32>
    %181 = arith.cmpi slt, %179, %180 : vector<1x256xi32>
    %182 = arith.andi %177, %181 : vector<1x256xi1>
    %183 = arith.andi %182, %3 : vector<1x256xi1>
    %c0_71 = arith.constant 0 : index
    %c0_72 = arith.constant 0 : index
    %c0_73 = arith.constant 0 : index
    %184 = vector.load %arg2[%c0_71, %c0_72, %c0_73] : memref<1x8x256xf32, #tpu.memory_space<vmem>>, vector<1x8x256xf32>
    %185 = vector.shape_cast %184 : vector<1x8x256xf32> to vector<8x256xf32>
    %c17_i32 = arith.constant 17 : i32
    %186 = tpu.dynamic_rotate %185 by %c17_i32 dim 1 : vector<8x256xf32>, i32 -> vector<8x256xf32>
    %cst = arith.constant 0.000000e+00 : f32
    %187 = vector.shape_cast %23 : vector<1x256xi1> to vector<1x256xi1>
    %188 = vector.broadcast %187 : vector<1x256xi1> to vector<8x256xi1>
    %189 = vector.broadcast %cst : f32 to vector<8x256xf32>
    %190 = arith.select %188, %186, %189 : vector<8x256xi1>, vector<8x256xf32>
    %c0_74 = arith.constant 0 : index
    %c0_75 = arith.constant 0 : index
    %191 = vector.load %arg6[%c0_74, %c0_75] : memref<72x256xf32, #tpu.memory_space<vmem>>, vector<8x256xf32>
    tpu.vector_store %arg6[%c0_74, %c0_75], %190 {strides = array<i32>} : memref<72x256xf32, #tpu.memory_space<vmem>>, vector<8x256xf32>,
    %c16_i32_76 = arith.constant 16 : i32
    %192 = tpu.dynamic_rotate %185 by %c16_i32_76 dim 1 : vector<8x256xf32>, i32 -> vector<8x256xf32>
    %cst_77 = arith.constant 0.000000e+00 : f32
    %193 = vector.shape_cast %43 : vector<1x256xi1> to vector<1x256xi1>
    %194 = vector.broadcast %193 : vector<1x256xi1> to vector<8x256xi1>
    %195 = vector.broadcast %cst_77 : f32 to vector<8x256xf32>
    %196 = arith.select %194, %192, %195 : vector<8x256xi1>, vector<8x256xf32>
    %c8 = arith.constant 8 : index
    %c0_78 = arith.constant 0 : index
    %197 = vector.load %arg6[%c8, %c0_78] : memref<72x256xf32, #tpu.memory_space<vmem>>, vector<8x256xf32>
    tpu.vector_store %arg6[%c8, %c0_78], %196 {strides = array<i32>} : memref<72x256xf32, #tpu.memory_space<vmem>>, vector<8x256xf32>,
    %c15_i32 = arith.constant 15 : i32
    %198 = tpu.dynamic_rotate %185 by %c15_i32 dim 1 : vector<8x256xf32>, i32 -> vector<8x256xf32>
    %cst_79 = arith.constant 0.000000e+00 : f32
    %199 = vector.shape_cast %63 : vector<1x256xi1> to vector<1x256xi1>
    %200 = vector.broadcast %199 : vector<1x256xi1> to vector<8x256xi1>
    %201 = vector.broadcast %cst_79 : f32 to vector<8x256xf32>
    %202 = arith.select %200, %198, %201 : vector<8x256xi1>, vector<8x256xf32>
    %c16 = arith.constant 16 : index
    %c0_80 = arith.constant 0 : index
    %203 = vector.load %arg6[%c16, %c0_80] : memref<72x256xf32, #tpu.memory_space<vmem>>, vector<8x256xf32>
    tpu.vector_store %arg6[%c16, %c0_80], %202 {strides = array<i32>} : memref<72x256xf32, #tpu.memory_space<vmem>>, vector<8x256xf32>,
    %c1_i32_81 = arith.constant 1 : i32
    %204 = tpu.dynamic_rotate %185 by %c1_i32_81 dim 1 : vector<8x256xf32>, i32 -> vector<8x256xf32>
    %cst_82 = arith.constant 0.000000e+00 : f32
    %205 = vector.shape_cast %83 : vector<1x256xi1> to vector<1x256xi1>
    %206 = vector.broadcast %205 : vector<1x256xi1> to vector<8x256xi1>
    %207 = vector.broadcast %cst_82 : f32 to vector<8x256xf32>
    %208 = arith.select %206, %204, %207 : vector<8x256xi1>, vector<8x256xf32>
    %c24 = arith.constant 24 : index
    %c0_83 = arith.constant 0 : index
    %209 = vector.load %arg6[%c24, %c0_83] : memref<72x256xf32, #tpu.memory_space<vmem>>, vector<8x256xf32>
    tpu.vector_store %arg6[%c24, %c0_83], %208 {strides = array<i32>} : memref<72x256xf32, #tpu.memory_space<vmem>>, vector<8x256xf32>,
    %cst_84 = arith.constant 0.000000e+00 : f32
    %210 = vector.shape_cast %103 : vector<1x256xi1> to vector<1x256xi1>
    %211 = vector.broadcast %210 : vector<1x256xi1> to vector<8x256xi1>
    %212 = vector.broadcast %cst_84 : f32 to vector<8x256xf32>
    %213 = arith.select %211, %185, %212 : vector<8x256xi1>, vector<8x256xf32>
    %c32 = arith.constant 32 : index
    %c0_85 = arith.constant 0 : index
    %214 = vector.load %arg6[%c32, %c0_85] : memref<72x256xf32, #tpu.memory_space<vmem>>, vector<8x256xf32>
    tpu.vector_store %arg6[%c32, %c0_85], %213 {strides = array<i32>} : memref<72x256xf32, #tpu.memory_space<vmem>>, vector<8x256xf32>,
    %c255_i32 = arith.constant 255 : i32
    %215 = tpu.dynamic_rotate %185 by %c255_i32 dim 1 : vector<8x256xf32>, i32 -> vector<8x256xf32>
    %cst_86 = arith.constant 0.000000e+00 : f32
    %216 = vector.shape_cast %123 : vector<1x256xi1> to vector<1x256xi1>
    %217 = vector.broadcast %216 : vector<1x256xi1> to vector<8x256xi1>
    %218 = vector.broadcast %cst_86 : f32 to vector<8x256xf32>
    %219 = arith.select %217, %215, %218 : vector<8x256xi1>, vector<8x256xf32>
    %c40 = arith.constant 40 : index
    %c0_87 = arith.constant 0 : index
    %220 = vector.load %arg6[%c40, %c0_87] : memref<72x256xf32, #tpu.memory_space<vmem>>, vector<8x256xf32>
    tpu.vector_store %arg6[%c40, %c0_87], %219 {strides = array<i32>} : memref<72x256xf32, #tpu.memory_space<vmem>>, vector<8x256xf32>,
    %c241_i32 = arith.constant 241 : i32
    %221 = tpu.dynamic_rotate %185 by %c241_i32 dim 1 : vector<8x256xf32>, i32 -> vector<8x256xf32>
    %cst_88 = arith.constant 0.000000e+00 : f32
    %222 = vector.shape_cast %143 : vector<1x256xi1> to vector<1x256xi1>
    %223 = vector.broadcast %222 : vector<1x256xi1> to vector<8x256xi1>
    %224 = vector.broadcast %cst_88 : f32 to vector<8x256xf32>
    %225 = arith.select %223, %221, %224 : vector<8x256xi1>, vector<8x256xf32>
    %c48 = arith.constant 48 : index
    %c0_89 = arith.constant 0 : index
    %226 = vector.load %arg6[%c48, %c0_89] : memref<72x256xf32, #tpu.memory_space<vmem>>, vector<8x256xf32>
    tpu.vector_store %arg6[%c48, %c0_89], %225 {strides = array<i32>} : memref<72x256xf32, #tpu.memory_space<vmem>>, vector<8x256xf32>,
    %c240_i32 = arith.constant 240 : i32
    %227 = tpu.dynamic_rotate %185 by %c240_i32 dim 1 : vector<8x256xf32>, i32 -> vector<8x256xf32>
    %cst_90 = arith.constant 0.000000e+00 : f32
    %228 = vector.shape_cast %163 : vector<1x256xi1> to vector<1x256xi1>
    %229 = vector.broadcast %228 : vector<1x256xi1> to vector<8x256xi1>
    %230 = vector.broadcast %cst_90 : f32 to vector<8x256xf32>
    %231 = arith.select %229, %227, %230 : vector<8x256xi1>, vector<8x256xf32>
    %c56 = arith.constant 56 : index
    %c0_91 = arith.constant 0 : index
    %232 = vector.load %arg6[%c56, %c0_91] : memref<72x256xf32, #tpu.memory_space<vmem>>, vector<8x256xf32>
    tpu.vector_store %arg6[%c56, %c0_91], %231 {strides = array<i32>} : memref<72x256xf32, #tpu.memory_space<vmem>>, vector<8x256xf32>,
    %c239_i32 = arith.constant 239 : i32
    %233 = tpu.dynamic_rotate %185 by %c239_i32 dim 1 : vector<8x256xf32>, i32 -> vector<8x256xf32>
    %cst_92 = arith.constant 0.000000e+00 : f32
    %234 = vector.shape_cast %183 : vector<1x256xi1> to vector<1x256xi1>
    %235 = vector.broadcast %234 : vector<1x256xi1> to vector<8x256xi1>
    %236 = vector.broadcast %cst_92 : f32 to vector<8x256xf32>
    %237 = arith.select %235, %233, %236 : vector<8x256xi1>, vector<8x256xf32>
    %c64 = arith.constant 64 : index
    %c0_93 = arith.constant 0 : index
    %238 = vector.load %arg6[%c64, %c0_93] : memref<72x256xf32, #tpu.memory_space<vmem>>, vector<8x256xf32>
    tpu.vector_store %arg6[%c64, %c0_93], %237 {strides = array<i32>} : memref<72x256xf32, #tpu.memory_space<vmem>>, vector<8x256xf32>,
    %c72 = arith.constant 72 : index
    %c0_94 = arith.constant 0 : index
    %239 = vector.load %arg7[%c72, %c0_94] : memref<80x256xf32, #tpu.memory_space<vmem>>, vector<8x256xf32>
    tpu.vector_store %arg7[%c72, %c0_94], %185 {strides = array<i32>} : memref<80x256xf32, #tpu.memory_space<vmem>>, vector<8x256xf32>,
    %c0_95 = arith.constant 0 : index
    %c0_96 = arith.constant 0 : index
    %240 = vector.load %arg3[%c0_95, %c0_96] : memref<8x72xf32, #tpu.memory_space<vmem>>, vector<8x72xf32>
    %c0_97 = arith.constant 0 : index
    %c0_98 = arith.constant 0 : index
    %241 = vector.load %arg6[%c0_97, %c0_98] : memref<72x256xf32, #tpu.memory_space<vmem>>, vector<72x256xf32>
    %cst_99 = arith.constant dense<0.000000e+00> : vector<8x256xf32>
    %242 = tpu.matmul %240, %241, %cst_99 {dimension_numbers = #tpu.dot_dimension_numbers<[1], [0], [0], [1], [0, 0, 1, 1], [], []>} : vector<8x72xf32>, vector<72x256xf32>, vector<8x256xf32> -> vector<8x256xf32>
    %cst_100 = arith.constant 0.000000e+00 : f32
    %243 = vector.broadcast %cst_100 : f32 to vector<8x256xf32>
    %244 = arith.maximumf %242, %243 : vector<8x256xf32>
    %c17_i32_101 = arith.constant 17 : i32
    %245 = tpu.dynamic_rotate %244 by %c17_i32_101 dim 1 : vector<8x256xf32>, i32 -> vector<8x256xf32>
    %cst_102 = arith.constant 0.000000e+00 : f32
    %246 = vector.shape_cast %23 : vector<1x256xi1> to vector<1x256xi1>
    %247 = vector.broadcast %246 : vector<1x256xi1> to vector<8x256xi1>
    %248 = vector.broadcast %cst_102 : f32 to vector<8x256xf32>
    %249 = arith.select %247, %245, %248 : vector<8x256xi1>, vector<8x256xf32>
    %c0_103 = arith.constant 0 : index
    %c0_104 = arith.constant 0 : index
    %250 = vector.load %arg7[%c0_103, %c0_104] : memref<80x256xf32, #tpu.memory_space<vmem>>, vector<8x256xf32>
    tpu.vector_store %arg7[%c0_103, %c0_104], %249 {strides = array<i32>} : memref<80x256xf32, #tpu.memory_space<vmem>>, vector<8x256xf32>,
    %c16_i32_105 = arith.constant 16 : i32
    %251 = tpu.dynamic_rotate %244 by %c16_i32_105 dim 1 : vector<8x256xf32>, i32 -> vector<8x256xf32>
    %cst_106 = arith.constant 0.000000e+00 : f32
    %252 = vector.shape_cast %43 : vector<1x256xi1> to vector<1x256xi1>
    %253 = vector.broadcast %252 : vector<1x256xi1> to vector<8x256xi1>
    %254 = vector.broadcast %cst_106 : f32 to vector<8x256xf32>
    %255 = arith.select %253, %251, %254 : vector<8x256xi1>, vector<8x256xf32>
    %c8_107 = arith.constant 8 : index
    %c0_108 = arith.constant 0 : index
    %256 = vector.load %arg7[%c8_107, %c0_108] : memref<80x256xf32, #tpu.memory_space<vmem>>, vector<8x256xf32>
    tpu.vector_store %arg7[%c8_107, %c0_108], %255 {strides = array<i32>} : memref<80x256xf32, #tpu.memory_space<vmem>>, vector<8x256xf32>,
    %c15_i32_109 = arith.constant 15 : i32
    %257 = tpu.dynamic_rotate %244 by %c15_i32_109 dim 1 : vector<8x256xf32>, i32 -> vector<8x256xf32>
    %cst_110 = arith.constant 0.000000e+00 : f32
    %258 = vector.shape_cast %63 : vector<1x256xi1> to vector<1x256xi1>
    %259 = vector.broadcast %258 : vector<1x256xi1> to vector<8x256xi1>
    %260 = vector.broadcast %cst_110 : f32 to vector<8x256xf32>
    %261 = arith.select %259, %257, %260 : vector<8x256xi1>, vector<8x256xf32>
    %c16_111 = arith.constant 16 : index
    %c0_112 = arith.constant 0 : index
    %262 = vector.load %arg7[%c16_111, %c0_112] : memref<80x256xf32, #tpu.memory_space<vmem>>, vector<8x256xf32>
    tpu.vector_store %arg7[%c16_111, %c0_112], %261 {strides = array<i32>} : memref<80x256xf32, #tpu.memory_space<vmem>>, vector<8x256xf32>,
    %c1_i32_113 = arith.constant 1 : i32
    %263 = tpu.dynamic_rotate %244 by %c1_i32_113 dim 1 : vector<8x256xf32>, i32 -> vector<8x256xf32>
    %cst_114 = arith.constant 0.000000e+00 : f32
    %264 = vector.shape_cast %83 : vector<1x256xi1> to vector<1x256xi1>
    %265 = vector.broadcast %264 : vector<1x256xi1> to vector<8x256xi1>
    %266 = vector.broadcast %cst_114 : f32 to vector<8x256xf32>
    %267 = arith.select %265, %263, %266 : vector<8x256xi1>, vector<8x256xf32>
    %c24_115 = arith.constant 24 : index
    %c0_116 = arith.constant 0 : index
    %268 = vector.load %arg7[%c24_115, %c0_116] : memref<80x256xf32, #tpu.memory_space<vmem>>, vector<8x256xf32>
    tpu.vector_store %arg7[%c24_115, %c0_116], %267 {strides = array<i32>} : memref<80x256xf32, #tpu.memory_space<vmem>>, vector<8x256xf32>,
    %cst_117 = arith.constant 0.000000e+00 : f32
    %269 = vector.shape_cast %103 : vector<1x256xi1> to vector<1x256xi1>
    %270 = vector.broadcast %269 : vector<1x256xi1> to vector<8x256xi1>
    %271 = vector.broadcast %cst_117 : f32 to vector<8x256xf32>
    %272 = arith.select %270, %244, %271 : vector<8x256xi1>, vector<8x256xf32>
    %c32_118 = arith.constant 32 : index
    %c0_119 = arith.constant 0 : index
    %273 = vector.load %arg7[%c32_118, %c0_119] : memref<80x256xf32, #tpu.memory_space<vmem>>, vector<8x256xf32>
    tpu.vector_store %arg7[%c32_118, %c0_119], %272 {strides = array<i32>} : memref<80x256xf32, #tpu.memory_space<vmem>>, vector<8x256xf32>,
    %c255_i32_120 = arith.constant 255 : i32
    %274 = tpu.dynamic_rotate %244 by %c255_i32_120 dim 1 : vector<8x256xf32>, i32 -> vector<8x256xf32>
    %cst_121 = arith.constant 0.000000e+00 : f32
    %275 = vector.shape_cast %123 : vector<1x256xi1> to vector<1x256xi1>
    %276 = vector.broadcast %275 : vector<1x256xi1> to vector<8x256xi1>
    %277 = vector.broadcast %cst_121 : f32 to vector<8x256xf32>
    %278 = arith.select %276, %274, %277 : vector<8x256xi1>, vector<8x256xf32>
    %c40_122 = arith.constant 40 : index
    %c0_123 = arith.constant 0 : index
    %279 = vector.load %arg7[%c40_122, %c0_123] : memref<80x256xf32, #tpu.memory_space<vmem>>, vector<8x256xf32>
    tpu.vector_store %arg7[%c40_122, %c0_123], %278 {strides = array<i32>} : memref<80x256xf32, #tpu.memory_space<vmem>>, vector<8x256xf32>,
    %c241_i32_124 = arith.constant 241 : i32
    %280 = tpu.dynamic_rotate %244 by %c241_i32_124 dim 1 : vector<8x256xf32>, i32 -> vector<8x256xf32>
    %cst_125 = arith.constant 0.000000e+00 : f32
    %281 = vector.shape_cast %143 : vector<1x256xi1> to vector<1x256xi1>
    %282 = vector.broadcast %281 : vector<1x256xi1> to vector<8x256xi1>
    %283 = vector.broadcast %cst_125 : f32 to vector<8x256xf32>
    %284 = arith.select %282, %280, %283 : vector<8x256xi1>, vector<8x256xf32>
    %c48_126 = arith.constant 48 : index
    %c0_127 = arith.constant 0 : index
    %285 = vector.load %arg7[%c48_126, %c0_127] : memref<80x256xf32, #tpu.memory_space<vmem>>, vector<8x256xf32>
    tpu.vector_store %arg7[%c48_126, %c0_127], %284 {strides = array<i32>} : memref<80x256xf32, #tpu.memory_space<vmem>>, vector<8x256xf32>,
    %c240_i32_128 = arith.constant 240 : i32
    %286 = tpu.dynamic_rotate %244 by %c240_i32_128 dim 1 : vector<8x256xf32>, i32 -> vector<8x256xf32>
    %cst_129 = arith.constant 0.000000e+00 : f32
    %287 = vector.shape_cast %163 : vector<1x256xi1> to vector<1x256xi1>
    %288 = vector.broadcast %287 : vector<1x256xi1> to vector<8x256xi1>
    %289 = vector.broadcast %cst_129 : f32 to vector<8x256xf32>
    %290 = arith.select %288, %286, %289 : vector<8x256xi1>, vector<8x256xf32>
    %c56_130 = arith.constant 56 : index
    %c0_131 = arith.constant 0 : index
    %291 = vector.load %arg7[%c56_130, %c0_131] : memref<80x256xf32, #tpu.memory_space<vmem>>, vector<8x256xf32>
    tpu.vector_store %arg7[%c56_130, %c0_131], %290 {strides = array<i32>} : memref<80x256xf32, #tpu.memory_space<vmem>>, vector<8x256xf32>,
    %c239_i32_132 = arith.constant 239 : i32
    %292 = tpu.dynamic_rotate %244 by %c239_i32_132 dim 1 : vector<8x256xf32>, i32 -> vector<8x256xf32>
    %cst_133 = arith.constant 0.000000e+00 : f32
    %293 = vector.shape_cast %183 : vector<1x256xi1> to vector<1x256xi1>
    %294 = vector.broadcast %293 : vector<1x256xi1> to vector<8x256xi1>
    %295 = vector.broadcast %cst_133 : f32 to vector<8x256xf32>
    %296 = arith.select %294, %292, %295 : vector<8x256xi1>, vector<8x256xf32>
    %c64_134 = arith.constant 64 : index
    %c0_135 = arith.constant 0 : index
    %297 = vector.load %arg7[%c64_134, %c0_135] : memref<80x256xf32, #tpu.memory_space<vmem>>, vector<8x256xf32>
    tpu.vector_store %arg7[%c64_134, %c0_135], %296 {strides = array<i32>} : memref<80x256xf32, #tpu.memory_space<vmem>>, vector<8x256xf32>,
    %c0_136 = arith.constant 0 : index
    %c0_137 = arith.constant 0 : index
    %298 = vector.load %arg4[%c0_136, %c0_137] : memref<8x80xf32, #tpu.memory_space<vmem>>, vector<8x80xf32>
    %c0_138 = arith.constant 0 : index
    %c0_139 = arith.constant 0 : index
    %299 = vector.load %arg7[%c0_138, %c0_139] : memref<80x256xf32, #tpu.memory_space<vmem>>, vector<80x256xf32>
    %cst_140 = arith.constant dense<0.000000e+00> : vector<8x256xf32>
    %300 = tpu.matmul %298, %299, %cst_140 {dimension_numbers = #tpu.dot_dimension_numbers<[1], [0], [0], [1], [0, 0, 1, 1], [], []>} : vector<8x80xf32>, vector<80x256xf32>, vector<8x256xf32> -> vector<8x256xf32>
    %cst_141 = arith.constant 0.000000e+00 : f32
    %301 = vector.broadcast %cst_141 : f32 to vector<8x256xf32>
    %302 = arith.maximumf %300, %301 : vector<8x256xf32>
    %303 = vector.shape_cast %302 : vector<8x256xf32> to vector<1x8x256xf32>
    %c0_142 = arith.constant 0 : index
    %c0_143 = arith.constant 0 : index
    %c0_144 = arith.constant 0 : index
    %304 = vector.load %arg5[%c0_142, %c0_143, %c0_144] : memref<1x8x256xf32, #tpu.memory_space<vmem>>, vector<1x8x256xf32>
    tpu.vector_store %arg5[%c0_142, %c0_143, %c0_144], %303 {strides = array<i32>} : memref<1x8x256xf32, #tpu.memory_space<vmem>>, vector<1x8x256xf32>,
    return
  }
  func.func @transform_0(%arg0: i32) -> (i32, i32) {
    %c0_i32 = arith.constant 0 : i32
    %c0_i32_0 = arith.constant 0 : i32
    %c0_i32_1 = arith.constant 0 : i32
    return %c0_i32, %c0_i32_0 : i32, i32
  }
  func.func @transform_1(%arg0: i32) -> (i32, i32, i32) {
    %c0_i32 = arith.constant 0 : i32
    %c0_i32_0 = arith.constant 0 : i32
    %c0_i32_1 = arith.constant 0 : i32
    return %arg0, %c0_i32, %c0_i32_0 : i32, i32, i32
  }
  func.func @transform_2(%arg0: i32) -> (i32, i32) {
    %c0_i32 = arith.constant 0 : i32
    %c0_i32_0 = arith.constant 0 : i32
    %c0_i32_1 = arith.constant 0 : i32
    return %c0_i32, %c0_i32_0 : i32, i32
  }
  func.func @transform_3(%arg0: i32) -> (i32, i32) {
    %c0_i32 = arith.constant 0 : i32
    %c0_i32_0 = arith.constant 0 : i32
    %c0_i32_1 = arith.constant 0 : i32
    return %c0_i32, %c0_i32_0 : i32, i32
  }
  func.func @transform_4(%arg0: i32) -> (i32, i32, i32) {
    %c0_i32 = arith.constant 0 : i32
    %c0_i32_0 = arith.constant 0 : i32
    %c0_i32_1 = arith.constant 0 : i32
    return %arg0, %c0_i32, %c0_i32_0 : i32, i32, i32
  }
}

</mosaic_0001>

<llo_original>
// kernel: tpu_custom_call.1
$region0: #{tpu_custom_call.1}
  #allocation0 [shape = 'u32[]', space=smem, size = 0x4, offset = 0x4, fixed_abs, tag = 'smem constant byte address 0x4 - core index']
  #allocation1 [shape = 'u32[144,128]{1,0:T(1,128)}', space=vmem, size = 0x12000, scoped, tag = 'internal scratch']
  #allocation2 [shape = 'f32[72,256]{1,0:T(8,128)}', space=vmem, size = 0x12000, scoped, tag = 'scratch operand']
  #allocation3 [shape = 'f32[80,256]{1,0:T(8,128)}', space=vmem, size = 0x14000, scoped, tag = 'scratch operand']
  %s0 = inlined_call_operand.hbm [shape: s32[2,256], index: 0, kind: input, shape index: {}]
  %s1 = inlined_call_operand.hbm [shape: f32[2,8,256], index: 1, kind: input, shape index: {}]
  %s2 = inlined_call_operand.hbm [shape: f32[8,72], index: 2, kind: input, shape index: {}]
  %s3 = inlined_call_operand.hbm [shape: f32[8,80], index: 3, kind: input, shape index: {}]
  %s4 = inlined_call_operand.hbm [shape: f32[2,8,256], index: 4, kind: output, shape index: {}]
  %s5 = sld [smem:[#allocation0]]
  $region65: #{tpu_custom_call.1} parent=0
    _
  %s7 = ssub.s32 1, %s5
  %s8 = scalar_select 0, %s7, %s5
  $region1: #{tpu_custom_call.1} parent=0
    #allocation4 [shape = 'u8[2048]{0}', space=vmem, size = 0x800, scoped, tag = 'input window, operand 0, single buffered']
    #allocation5 [shape = 's32[2]{0}', space=sflag, size = 0x8, scoped, tag = 'scoped memory for tpu_custom_call.1']
    #allocation6 [shape = 's32[2]{0}', space=sflag, size = 0x8, scoped, tag = 'scoped memory for tpu_custom_call.1']
    #allocation7 [shape = 'u8[16384]{0}', space=vmem, size = 0x4000, scoped, tag = 'input window, operand 1']
    #allocation8 [shape = 's32[2]{0}', space=sflag, size = 0x8, scoped, tag = 'scoped memory for tpu_custom_call.1']
    #allocation9 [shape = 'u8[4096]{0}', space=vmem, size = 0x1000, scoped, tag = 'input window, operand 2, single buffered']
    #allocation10 [shape = 'u8[4096]{0}', space=vmem, size = 0x1000, scoped, tag = 'input window, operand 3, single buffered']
    #allocation11 [shape = 's32[1]{0}', space=sflag, size = 0x4, scoped, tag = 'scoped memory for tpu_custom_call.1']
    #allocation12 [shape = 'u8[16384]{0}', space=vmem, size = 0x4000, scoped, tag = 'output window, operand 0']
    %9 = vsyncpa [#allocation5], 0
    %10 = vsyncpa [#allocation8], 0
    %s11 = scalar_lea.sflag [#allocation8], 1
    %12 = vsyncpa %s11, 0
    %13 = vsyncpa [#allocation11], 0
    %14 = vsyncpa [#allocation6], 0
    %s15 = scalar_lea.sflag [#allocation6], 1
    %16 = vsyncpa %s15, 0
    loop: start=0, step=1, limit=4
    $region2: #{tpu_custom_call.1} parent=1 // loop_pre_header
      _
    $region3: #{tpu_custom_call.1} parent=1 // loop_header
      %s18 = sphi 0, %s22
      %p19 = scmp.ge.s32.totalorder %s18, 4
      %s26 = sphi 0, %s26
      %s28 = sphi 0, %s26
      %s29 = sphi 0, %s28
      %s43 = sphi 0, %s29
      %s49 = sphi 0, %s51
      %s52 = sphi 0, %s49
      %s53 = sphi 0, %s52
      %s69 = sphi 0, %s53
      %s73 = sphi 0, %s73
      %s75 = sphi 0, %s73
      %s76 = sphi 0, %s75
      %s90 = sphi 0, %s76
      %s94 = sphi 0, %s94
      %s96 = sphi 0, %s94
      %s97 = sphi 0, %s96
      %s111 = sphi 0, %s97
      %s117 = sphi 0, %s119
      %s120 = sphi 0, %s117
      %s121 = sphi 0, %s120
      %s137 = sphi 0, %s121
    $region4: #{tpu_custom_call.1} parent=1 // loop_header_branch
      %21 = sbr.rel (%p19) target = $region8
    $region5: #{tpu_custom_call.1} parent=1 // loop_body
      %s23 = ssub.s32 %s18, 1
      %s24 = ssub.s32 %s18, 2
      %s25 = sadd.s32 %s18, 1
      %s27 = sadd.s32 %s26, 1
      %p30 = scmp.eq.s32.totalorder %s18, 1
      %p31 = scmp.ne.s32.totalorder %s26, %s28
      %p32 = scmp.eq.s32.totalorder %s18, 0
      %p33 = por %p31, %p32
      %p34 = scmp.ne.s32.totalorder %s26, %s28
      %p35 = scmp.eq.s32.totalorder %s23, 1
      %p36 = por %p34, %p35
      %p37 = scmp.ne.s32.totalorder %s28, %s29
      %p38 = scmp.eq.s32.totalorder %s23, 0
      %p39 = por %p37, %p38
      %p40 = scmp.ne.s32.totalorder %s28, %s29
      %p41 = scmp.eq.s32.totalorder %s24, 1
      %p42 = por %p40, %p41
      %p44 = scmp.ne.s32.totalorder %s29, %s43
      %p45 = scmp.eq.s32.totalorder %s24, 0
      %p46 = por %p44, %p45
      %s47 = ssub.s32 %s18, %s25
      %p48 = scmp.eq.s32.totalorder %s47, 0
      %s50 = sadd.s32 %s49, 1
      %s51 = scalar_select %p48, %s49, %s50
      %p54 = pneg %p48
      %p55 = scmp.eq.s32.totalorder %s18, 1
      %p56 = por %p54, %p55
      %p57 = scmp.ne.s32.totalorder %s49, %s52
      %p58 = scmp.eq.s32.totalorder %s18, 0
      %p59 = por %p57, %p58
      %p60 = scmp.ne.s32.totalorder %s49, %s52
      %p61 = scmp.eq.s32.totalorder %s23, 1
      %p62 = por %p60, %p61
      %p63 = scmp.ne.s32.totalorder %s52, %s53
      %p64 = scmp.eq.s32.totalorder %s23, 0
      %p65 = por %p63, %p64
      %p66 = scmp.ne.s32.totalorder %s52, %s53
      %p67 = scmp.eq.s32.totalorder %s24, 1
      %p68 = por %p66, %p67
      %p70 = scmp.ne.s32.totalorder %s53, %s69
      %p71 = scmp.eq.s32.totalorder %s24, 0
      %p72 = por %p70, %p71
      %s74 = sadd.s32 %s73, 1
      %p77 = scmp.eq.s32.totalorder %s18, 1
      %p78 = scmp.ne.s32.totalorder %s73, %s75
      %p79 = scmp.eq.s32.totalorder %s18, 0
      %p80 = por %p78, %p79
      %p81 = scmp.ne.s32.totalorder %s73, %s75
      %p82 = scmp.eq.s32.totalorder %s23, 1
      %p83 = por %p81, %p82
      %p84 = scmp.ne.s32.totalorder %s75, %s76
      %p85 = scmp.eq.s32.totalorder %s23, 0
      %p86 = por %p84, %p85
      %p87 = scmp.ne.s32.totalorder %s75, %s76
      %p88 = scmp.eq.s32.totalorder %s24, 1
      %p89 = por %p87, %p88
      %p91 = scmp.ne.s32.totalorder %s76, %s90
      %p92 = scmp.eq.s32.totalorder %s24, 0
      %p93 = por %p91, %p92
      %s95 = sadd.s32 %s94, 1
      %p98 = scmp.eq.s32.totalorder %s18, 1
      %p99 = scmp.ne.s32.totalorder %s94, %s96
      %p100 = scmp.eq.s32.totalorder %s18, 0
      %p101 = por %p99, %p100
      %p102 = scmp.ne.s32.totalorder %s94, %s96
      %p103 = scmp.eq.s32.totalorder %s23, 1
      %p104 = por %p102, %p103
      %p105 = scmp.ne.s32.totalorder %s96, %s97
      %p106 = scmp.eq.s32.totalorder %s23, 0
      %p107 = por %p105, %p106
      %p108 = scmp.ne.s32.totalorder %s96, %s97
      %p109 = scmp.eq.s32.totalorder %s24, 1
      %p110 = por %p108, %p109
      %p112 = scmp.ne.s32.totalorder %s97, %s111
      %p113 = scmp.eq.s32.totalorder %s24, 0
      %p114 = por %p112, %p113
      %s115 = ssub.s32 %s18, %s25
      %p116 = scmp.eq.s32.totalorder %s115, 0
      %s118 = sadd.s32 %s117, 1
      %s119 = scalar_select %p116, %s117, %s118
      %p122 = pneg %p116
      %p123 = scmp.eq.s32.totalorder %s18, 1
      %p124 = por %p122, %p123
      %p125 = scmp.ne.s32.totalorder %s117, %s120
      %p126 = scmp.eq.s32.totalorder %s18, 0
      %p127 = por %p125, %p126
      %p128 = scmp.ne.s32.totalorder %s117, %s120
      %p129 = scmp.eq.s32.totalorder %s23, 1
      %p130 = por %p128, %p129
      %p131 = scmp.ne.s32.totalorder %s120, %s121
      %p132 = scmp.eq.s32.totalorder %s23, 0
      %p133 = por %p131, %p132
      %p134 = scmp.ne.s32.totalorder %s120, %s121
      %p135 = scmp.eq.s32.totalorder %s24, 1
      %p136 = por %p134, %p135
      %p138 = scmp.ne.s32.totalorder %s121, %s137
      %p139 = scmp.eq.s32.totalorder %s24, 0
      %p140 = por %p138, %p139
      %p141 = scmp.le.s32.totalorder 1, %s18
      %p142 = scmp.lt.s32.totalorder %s18, 3
      %p143 = pnand %p141, %p142
      %p144 = pneg %p143
      // Predicated region
      $region9: #{tpu_custom_call.1} parent=5 // pred_check
        _
      $region10: #{tpu_custom_call.1} parent=5 // pred_check_branch
        %146 = sbr.rel (%p143) target = $region12
      $region11: #{tpu_custom_call.1} parent=5 // pred_region
        %s147 = ssub.s32 %s18, 1
        // Predicated region
        $region13: #{tpu_custom_call.1} parent=11 // pred_check
          %p148 = pneg %p39
        $region14: #{tpu_custom_call.1} parent=11 // pred_check_branch
          %150 = sbr.rel (%p148) target = $region16
        $region15: #{tpu_custom_call.1} parent=11 // pred_region
          %s152 = ssub.s32 64, 64
          %153 = vsyncadd [#allocation5], %s152
          %s155 = sshll.u32 [#allocation4], 4
          %s156 = int_to_ptr.vmem [resolvable:$true] %s155
          %158 = dma.hbm_to_vmem [thread:$0]  %s0, 64, %s156, [#allocation5]
        $region16: #{tpu_custom_call.1} parent=11 // pred_fallthru
          _
        // Predicated region
        $region17: #{tpu_custom_call.1} parent=11 // pred_check
          %p159 = pneg %p86
        $region18: #{tpu_custom_call.1} parent=11 // pred_check_branch
          %161 = sbr.rel (%p159) target = $region20
        $region19: #{tpu_custom_call.1} parent=11 // pred_region
          %s163 = ssub.s32 128, 128
          %164 = vsyncadd [#allocation8], %s163
          %s166 = sshll.u32 [#allocation9], 4
          %s167 = int_to_ptr.vmem [resolvable:$true] %s166
          %169 = dma.hbm_to_vmem [thread:$0]  %s2, 128, %s167, [#allocation8]
        $region20: #{tpu_custom_call.1} parent=11 // pred_fallthru
          _
        // Predicated region
        $region21: #{tpu_custom_call.1} parent=11 // pred_check
          %p170 = pneg %p107
        $region22: #{tpu_custom_call.1} parent=11 // pred_check_branch
          %172 = sbr.rel (%p170) target = $region24
        $region23: #{tpu_custom_call.1} parent=11 // pred_region
          %s174 = ssub.s32 128, 128
          %175 = vsyncadd [#allocation11], %s174
          %s177 = sshll.u32 [#allocation10], 4
          %s178 = int_to_ptr.vmem [resolvable:$true] %s177
          %180 = dma.hbm_to_vmem [thread:$0]  %s3, 128, %s178, [#allocation11]
        $region24: #{tpu_custom_call.1} parent=11 // pred_fallthru
          _
      $region12: #{tpu_custom_call.1} parent=5 // pred_fallthru
        _
      %p181 = scmp.lt.s32.totalorder %s18, 2
      // Predicated region
      $region25: #{tpu_custom_call.1} parent=5 // pred_check
        %p182 = pneg %p181
      $region26: #{tpu_custom_call.1} parent=5 // pred_check_branch
        %184 = sbr.rel (%p182) target = $region28
      $region27: #{tpu_custom_call.1} parent=5 // pred_region
        // Predicated region
        $region29: #{tpu_custom_call.1} parent=27 // pred_check
          %p185 = pneg %p59
        $region30: #{tpu_custom_call.1} parent=27 // pred_check_branch
          %187 = sbr.rel (%p185) target = $region32
        $region31: #{tpu_custom_call.1} parent=27 // pred_region
          %s188 = sand.u32 %s18, 1
          %s189 = scalar_lea.sflag [#allocation8], %s188
          %s190 = sand.u32 %s49, 1
          %s191 = smul.addr %s190, 16
          %s192 = scalar_lea.vmem [#allocation7], %s191
          %s194 = ssub.s32 256, 256
          %195 = vsyncadd %s189, %s194
          %s196 = smul.addr %s18, 2
          %s197 = smul.addr %s196, 128
          %s198 = scalar_lea.hbm %s1, %s197
          %s200 = sshll.u32 %s192, 4
          %s201 = int_to_ptr.vmem [resolvable:$true] %s200
          %203 = dma.hbm_to_vmem [thread:$0]  %s198, 256, %s201, %s189
        $region32: #{tpu_custom_call.1} parent=27 // pred_fallthru
          _
      $region28: #{tpu_custom_call.1} parent=5 // pred_fallthru
        _
      %p204 = scmp.le.s32.totalorder 1, %s18
      %p205 = scmp.lt.s32.totalorder %s18, 3
      %p206 = pnand %p204, %p205
      %p207 = pneg %p206
      // Predicated region
      $region33: #{tpu_custom_call.1} parent=5 // pred_check
        _
      $region34: #{tpu_custom_call.1} parent=5 // pred_check_branch
        %209 = sbr.rel (%p206) target = $region36
      $region35: #{tpu_custom_call.1} parent=5 // pred_region
        %s210 = ssub.s32 %s18, 1
        // Predicated region
        $region37: #{tpu_custom_call.1} parent=35 // pred_check
          %p211 = pneg %p39
        $region38: #{tpu_custom_call.1} parent=35 // pred_check_branch
          %213 = sbr.rel (%p211) target = $region40
        $region39: #{tpu_custom_call.1} parent=35 // pred_region
          %214 = dma.done [#allocation5], 64
        $region40: #{tpu_custom_call.1} parent=35 // pred_fallthru
          _
        %s215 = sand.u32 %s23, 1
        %s216 = scalar_lea.sflag [#allocation8], %s215
        %s217 = sand.u32 %s52, 1
        %s218 = smul.addr %s217, 16
        %s219 = scalar_lea.vmem [#allocation7], %s218
        // Predicated region
        $region41: #{tpu_custom_call.1} parent=35 // pred_check
          %p220 = pneg %p65
        $region42: #{tpu_custom_call.1} parent=35 // pred_check_branch
          %222 = sbr.rel (%p220) target = $region44
        $region43: #{tpu_custom_call.1} parent=35 // pred_region
          %223 = dma.done %s216, 256
        $region44: #{tpu_custom_call.1} parent=35 // pred_fallthru
          _
        // Predicated region
        $region45: #{tpu_custom_call.1} parent=35 // pred_check
          %p224 = pneg %p86
        $region46: #{tpu_custom_call.1} parent=35 // pred_check_branch
          %226 = sbr.rel (%p224) target = $region48
        $region47: #{tpu_custom_call.1} parent=35 // pred_region
          %227 = dma.done [#allocation8], 128
        $region48: #{tpu_custom_call.1} parent=35 // pred_fallthru
          _
        // Predicated region
        $region49: #{tpu_custom_call.1} parent=35 // pred_check
          %p228 = pneg %p107
        $region50: #{tpu_custom_call.1} parent=35 // pred_check_branch
          %230 = sbr.rel (%p228) target = $region52
        $region51: #{tpu_custom_call.1} parent=35 // pred_region
          %231 = dma.done [#allocation11], 128
        $region52: #{tpu_custom_call.1} parent=35 // pred_fallthru
          _
        %p232 = pneg %p39
        %p233 = pneg %p36
        %s234 = sand.u32 %s23, 1
        %s235 = scalar_lea.sflag [#allocation8], %s234
        %s236 = sand.u32 %s52, 1
        %s237 = smul.addr %s236, 16
        %s238 = scalar_lea.vmem [#allocation7], %s237
        %p239 = pneg %p65
        %p240 = pneg %p62
        %p241 = pneg %p86
        %p242 = pneg %p83
        %p243 = pneg %p107
        %p244 = pneg %p104
        %p245 = pneg %p133
        %p246 = pneg %p130
        %s247 = sand.u32 %s120, 1
        %s248 = scalar_lea.sflag [#allocation6], %s247
        %s249 = sand.u32 %s120, 1
        %s250 = smul.addr %s249, 16
        %s251 = scalar_lea.vmem [#allocation12], %s250
        %v252 = vld [vmem:[#allocation4] ss:$2 sm:$0x3]
        %s253 = scalar_lea.vmem [#allocation4], 1
        %v254 = vld [vmem:[%s253] ss:$2 sm:$0x3]
        %vm255 = vcmp.lt.s32.totalorder %v252, 16
        %v256 = vadd.s32 %v252, 4294967295
        %vm257 = vcmp.ge.s32.totalorder %v256, 0
        %vm258 = vcmp.lt.s32.totalorder %v256, 16
        %vm259 = vmand %vm257, %vm258
        %v260 = vadd.s32 %v254, 4294967295
        %vm261 = vcmp.ge.s32.totalorder %v260, 0
        %vm262 = vmand %vm259, %vm261
        %vm263 = vcmp.lt.s32.totalorder %v260, 16
        %vm264 = vmand %vm262, %vm263
        %vm265 = vmand %vm264, %vm255
        %vm266 = vcmp.ge.s32.totalorder %v254, 0
        %vm267 = vmand %vm259, %vm266
        %vm268 = vcmp.lt.s32.totalorder %v254, 16
        %vm269 = vmand %vm267, %vm268
        %vm270 = vmand %vm269, %vm255
        %v271 = vadd.s32 %v254, 1
        %vm272 = vcmp.ge.s32.totalorder %v271, 0
        %vm273 = vmand %vm259, %vm272
        %vm274 = vcmp.lt.s32.totalorder %v271, 16
        %vm275 = vmand %vm273, %vm274
        %vm276 = vmand %vm275, %vm255
        %vm277 = vcmp.ge.s32.totalorder %v252, 0
        %vm278 = vmand %vm277, %vm255
        %vm279 = vmand %vm278, %vm261
        %vm280 = vmand %vm279, %vm263
        %vm281 = vmand %vm280, %vm255
        %vm282 = vmand %vm278, %vm266
        %vm283 = vmand %vm282, %vm268
        %vm284 = vmand %vm283, %vm255
        %vm285 = vmand %vm278, %vm272
        %vm286 = vmand %vm285, %vm274
        %vm287 = vmand %vm286, %vm255
        %v288 = vadd.s32 %v252, 1
        %vm289 = vcmp.ge.s32.totalorder %v288, 0
        %vm290 = vcmp.lt.s32.totalorder %v288, 16
        %vm291 = vmand %vm289, %vm290
        %vm292 = vmand %vm291, %vm261
        %vm293 = vmand %vm292, %vm263
        %vm294 = vmand %vm293, %vm255
        %vm295 = vmand %vm291, %vm266
        %vm296 = vmand %vm295, %vm268
        %vm297 = vmand %vm296, %vm255
        %vm298 = vmand %vm291, %vm272
        %vm299 = vmand %vm298, %vm274
        %vm300 = vmand %vm299, %vm255
        %v301 = vld [vmem:[%s219] sm:$0xff]
        %v302 = vld [vmem:[%s219 + $0x8] sm:$0xff]
        %303 = vrot.lane.b32.xlu0 %v301, 17
        %v304 = vpop.permute.xlu0 %303
        %305 = vrot.lane.b32.xlu0 %v302, 17
        %v306 = vpop.permute.xlu0 %305
        %v307 = vlaneseq
        %v308 = vand.u32 %v307, 127
        %vm309 = vcmp.lt.s32.totalorder %v308, 17
        %v310 = vsel %vm309, %v304, %v306
        %v311 = vsel %vm309, %v306, %v304
        %v312 = vsel %vm265, 1, 0
        %v313 = vlaneseq
        %v314 = vshrl.u32 %v313, 7
        %v315 = vsub.s32 0, %v314
        %v316 = vrot.slane %v312, %v315
        %v317 = vlaneseq
        %v318 = vshrl.u32 %v317, 7
        %v319 = vsub.s32 1, %v318
        %v320 = vrot.slane %v312, %v319
        %vm321 = vcmp.eq.s32.totalorder %v316, 1
        %vm322 = vcmp.eq.s32.totalorder %v320, 1
        %v323 = vsel %vm321, %v311, 0.0
        %v324 = vsel %vm322, %v310, 0.0
        %325 = vst [vmem:[#allocation2] sm:$0xff] %v323
        %326 = vst [vmem:[#allocation2 + $0x8] sm:$0xff] %v324
        %327 = vrot.lane.b32.xlu0 %v301, 16
        %v328 = vpop.permute.xlu0 %327
        %329 = vrot.lane.b32.xlu0 %v302, 16
        %v330 = vpop.permute.xlu0 %329
        %vm331 = vcmp.lt.s32.totalorder %v308, 16
        %v332 = vsel %vm331, %v328, %v330
        %v333 = vsel %vm331, %v330, %v328
        %v334 = vsel %vm270, 1, 0
        %v335 = vlaneseq
        %v336 = vshrl.u32 %v335, 7
        %v337 = vsub.s32 0, %v336
        %v338 = vrot.slane %v334, %v337
        %v339 = vlaneseq
        %v340 = vshrl.u32 %v339, 7
        %v341 = vsub.s32 1, %v340
        %v342 = vrot.slane %v334, %v341
        %vm343 = vcmp.eq.s32.totalorder %v338, 1
        %vm344 = vcmp.eq.s32.totalorder %v342, 1
        %v345 = vsel %vm343, %v333, 0.0
        %v346 = vsel %vm344, %v332, 0.0
        %347 = vst [vmem:[#allocation2 + $0x10] sm:$0xff] %v345
        %348 = vst [vmem:[#allocation2 + $0x18] sm:$0xff] %v346
        %349 = vrot.lane.b32.xlu0 %v301, 15
        %v350 = vpop.permute.xlu0 %349
        %351 = vrot.lane.b32.xlu0 %v302, 15
        %v352 = vpop.permute.xlu0 %351
        %vm353 = vcmp.lt.s32.totalorder %v308, 15
        %v354 = vsel %vm353, %v350, %v352
        %v355 = vsel %vm353, %v352, %v350
        %v356 = vsel %vm276, 1, 0
        %v357 = vlaneseq
        %v358 = vshrl.u32 %v357, 7
        %v359 = vsub.s32 0, %v358
        %v360 = vrot.slane %v356, %v359
        %v361 = vlaneseq
        %v362 = vshrl.u32 %v361, 7
        %v363 = vsub.s32 1, %v362
        %v364 = vrot.slane %v356, %v363
        %vm365 = vcmp.eq.s32.totalorder %v360, 1
        %vm366 = vcmp.eq.s32.totalorder %v364, 1
        %v367 = vsel %vm365, %v355, 0.0
        %v368 = vsel %vm366, %v354, 0.0
        %369 = vst [vmem:[#allocation2 + $0x20] sm:$0xff] %v367
        %370 = vst [vmem:[#allocation2 + $0x28] sm:$0xff] %v368
        %371 = vrot.lane.b32.xlu0 %v301, 1
        %v372 = vpop.permute.xlu0 %371
        %373 = vrot.lane.b32.xlu0 %v302, 1
        %v374 = vpop.permute.xlu0 %373
        %vm375 = vcmp.lt.s32.totalorder %v308, 1
        %v376 = vsel %vm375, %v372, %v374
        %v377 = vsel %vm375, %v374, %v372
        %v378 = vsel %vm281, 1, 0
        %v379 = vlaneseq
        %v380 = vshrl.u32 %v379, 7
        %v381 = vsub.s32 0, %v380
        %v382 = vrot.slane %v378, %v381
        %v383 = vlaneseq
        %v384 = vshrl.u32 %v383, 7
        %v385 = vsub.s32 1, %v384
        %v386 = vrot.slane %v378, %v385
        %vm387 = vcmp.eq.s32.totalorder %v382, 1
        %vm388 = vcmp.eq.s32.totalorder %v386, 1
        %v389 = vsel %vm387, %v377, 0.0
        %v390 = vsel %vm388, %v376, 0.0
        %391 = vst [vmem:[#allocation2 + $0x30] sm:$0xff] %v389
        %392 = vst [vmem:[#allocation2 + $0x38] sm:$0xff] %v390
        %v393 = vsel %vm284, 1, 0
        %v394 = vlaneseq
        %v395 = vshrl.u32 %v394, 7
        %v396 = vsub.s32 0, %v395
        %v397 = vrot.slane %v393, %v396
        %v398 = vlaneseq
        %v399 = vshrl.u32 %v398, 7
        %v400 = vsub.s32 1, %v399
        %v401 = vrot.slane %v393, %v400
        %vm402 = vcmp.eq.s32.totalorder %v397, 1
        %vm403 = vcmp.eq.s32.totalorder %v401, 1
        %v404 = vsel %vm402, %v301, 0.0
        %v405 = vsel %vm403, %v302, 0.0
        %406 = vst [vmem:[#allocation2 + $0x40] sm:$0xff] %v404
        %407 = vst [vmem:[#allocation2 + $0x48] sm:$0xff] %v405
        %408 = vrot.lane.b32.xlu0 %v301, 127
        %v409 = vpop.permute.xlu0 %408
        %410 = vrot.lane.b32.xlu0 %v302, 127
        %v411 = vpop.permute.xlu0 %410
        %vm412 = vcmp.lt.s32.totalorder %v308, 127
        %v413 = vsel %vm412, %v409, %v411
        %v414 = vsel %vm412, %v411, %v409
        %v415 = vsel %vm287, 1, 0
        %v416 = vlaneseq
        %v417 = vshrl.u32 %v416, 7
        %v418 = vsub.s32 0, %v417
        %v419 = vrot.slane %v415, %v418
        %v420 = vlaneseq
        %v421 = vshrl.u32 %v420, 7
        %v422 = vsub.s32 1, %v421
        %v423 = vrot.slane %v415, %v422
        %vm424 = vcmp.eq.s32.totalorder %v419, 1
        %vm425 = vcmp.eq.s32.totalorder %v423, 1
        %v426 = vsel %vm424, %v413, 0.0
        %v427 = vsel %vm425, %v414, 0.0
        %428 = vst [vmem:[#allocation2 + $0x50] sm:$0xff] %v426
        %429 = vst [vmem:[#allocation2 + $0x58] sm:$0xff] %v427
        %430 = vrot.lane.b32.xlu0 %v301, 113
        %v431 = vpop.permute.xlu0 %430
        %432 = vrot.lane.b32.xlu0 %v302, 113
        %v433 = vpop.permute.xlu0 %432
        %vm434 = vcmp.lt.s32.totalorder %v308, 113
        %v435 = vsel %vm434, %v431, %v433
        %v436 = vsel %vm434, %v433, %v431
        %v437 = vsel %vm294, 1, 0
        %v438 = vlaneseq
        %v439 = vshrl.u32 %v438, 7
        %v440 = vsub.s32 0, %v439
        %v441 = vrot.slane %v437, %v440
        %v442 = vlaneseq
        %v443 = vshrl.u32 %v442, 7
        %v444 = vsub.s32 1, %v443
        %v445 = vrot.slane %v437, %v444
        %vm446 = vcmp.eq.s32.totalorder %v441, 1
        %vm447 = vcmp.eq.s32.totalorder %v445, 1
        %v448 = vsel %vm446, %v435, 0.0
        %v449 = vsel %vm447, %v436, 0.0
        %450 = vst [vmem:[#allocation2 + $0x60] sm:$0xff] %v448
        %451 = vst [vmem:[#allocation2 + $0x68] sm:$0xff] %v449
        %452 = vrot.lane.b32.xlu0 %v301, 112
        %v453 = vpop.permute.xlu0 %452
        %454 = vrot.lane.b32.xlu0 %v302, 112
        %v455 = vpop.permute.xlu0 %454
        %vm456 = vcmp.lt.s32.totalorder %v308, 112
        %v457 = vsel %vm456, %v453, %v455
        %v458 = vsel %vm456, %v455, %v453
        %v459 = vsel %vm297, 1, 0
        %v460 = vlaneseq
        %v461 = vshrl.u32 %v460, 7
        %v462 = vsub.s32 0, %v461
        %v463 = vrot.slane %v459, %v462
        %v464 = vlaneseq
        %v465 = vshrl.u32 %v464, 7
        %v466 = vsub.s32 1, %v465
        %v467 = vrot.slane %v459, %v466
        %vm468 = vcmp.eq.s32.totalorder %v463, 1
        %vm469 = vcmp.eq.s32.totalorder %v467, 1
        %v470 = vsel %vm468, %v457, 0.0
        %v471 = vsel %vm469, %v458, 0.0
        %472 = vst [vmem:[#allocation2 + $0x70] sm:$0xff] %v470
        %473 = vst [vmem:[#allocation2 + $0x78] sm:$0xff] %v471
        %474 = vrot.lane.b32.xlu0 %v301, 111
        %v475 = vpop.permute.xlu0 %474
        %476 = vrot.lane.b32.xlu0 %v302, 111
        %v477 = vpop.permute.xlu0 %476
        %vm478 = vcmp.lt.s32.totalorder %v308, 111
        %v479 = vsel %vm478, %v475, %v477
        %v480 = vsel %vm478, %v477, %v475
        %v481 = vsel %vm300, 1, 0
        %v482 = vlaneseq
        %v483 = vshrl.u32 %v482, 7
        %v484 = vsub.s32 0, %v483
        %v485 = vrot.slane %v481, %v484
        %v486 = vlaneseq
        %v487 = vshrl.u32 %v486, 7
        %v488 = vsub.s32 1, %v487
        %v489 = vrot.slane %v481, %v488
        %vm490 = vcmp.eq.s32.totalorder %v485, 1
        %vm491 = vcmp.eq.s32.totalorder %v489, 1
        %v492 = vsel %vm490, %v479, 0.0
        %v493 = vsel %vm491, %v480, 0.0
        %494 = vst [vmem:[#allocation2 + $0x80] sm:$0xff] %v492
        %495 = vst [vmem:[#allocation2 + $0x88] sm:$0xff] %v493
        %496 = vst [vmem:[#allocation3 + $0x90] sm:$0xff] %v301
        %497 = vst [vmem:[#allocation3 + $0x98] sm:$0xff] %v302
        %v498 = vld [vmem:[#allocation9] sm:$0xff]
        %v499 = vld [vmem:[#allocation2] sm:$0xff]
        %v500 = vld [vmem:[#allocation2 + $0x8] sm:$0xff]
        %v501 = vld [vmem:[#allocation2 + $0x10] sm:$0xff]
        %v502 = vld [vmem:[#allocation2 + $0x18] sm:$0xff]
        %v503 = vld [vmem:[#allocation2 + $0x20] sm:$0xff]
        %v504 = vld [vmem:[#allocation2 + $0x28] sm:$0xff]
        %v505 = vld [vmem:[#allocation2 + $0x30] sm:$0xff]
        %v506 = vld [vmem:[#allocation2 + $0x38] sm:$0xff]
        %v507 = vld [vmem:[#allocation2 + $0x40] sm:$0xff]
        %v508 = vld [vmem:[#allocation2 + $0x48] sm:$0xff]
        %v509 = vld [vmem:[#allocation2 + $0x50] sm:$0xff]
        %v510 = vld [vmem:[#allocation2 + $0x58] sm:$0xff]
        %v511 = vld [vmem:[#allocation2 + $0x60] sm:$0xff]
        %v512 = vld [vmem:[#allocation2 + $0x68] sm:$0xff]
        %v513 = vld [vmem:[#allocation2 + $0x70] sm:$0xff]
        %v514 = vld [vmem:[#allocation2 + $0x78] sm:$0xff]
        %v515 = vld [vmem:[#allocation2 + $0x80] sm:$0xff]
        %v516 = vld [vmem:[#allocation2 + $0x88] sm:$0xff]
        %vm517 = vcmask 588800
        %v519 = vsel %vm517, %v498, 0
        %521 = vmatprep.subr.mxu0 0.0
        %522 = vmatpush1.msra.mxu0 0.0
        %523 = vmatprep.subr.mxu0 0.0
        %524 = vmatpush1.msra.mxu0 0.0
        %525 = vmatprep.subr.mxu0 0.0
        %526 = vmatpush1.msra.mxu0 0.0
        %527 = vmatprep.subr.mxu0 0.0
        %528 = vmatpush1.msra.mxu0 0.0
        %529 = vmatprep.subr.mxu0 0.0
        %530 = vmatpush1.msra.mxu0 0.0
        %531 = vmatprep.subr.mxu0 0.0
        %532 = vmatpush1.msra.mxu0 0.0
        %533 = vmatprep.subr.mxu0 0.0
        %534 = vmatpush1.msra.mxu0 0.0
        %535 = vmatprep.subr.mxu0 %v516
        %536 = vmatpush1.msra.mxu0 %v515
        %537 = vmatprep.subr.mxu0 %v514
        %538 = vmatpush1.msra.mxu0 %v513
        %539 = vmatprep.subr.mxu0 %v512
        %540 = vmatpush1.msra.mxu0 %v511
        %541 = vmatprep.subr.mxu0 %v510
        %542 = vmatpush1.msra.mxu0 %v509
        %543 = vmatprep.subr.mxu0 %v508
        %544 = vmatpush1.msra.mxu0 %v507
        %545 = vmatprep.subr.mxu0 %v506
        %546 = vmatpush1.msra.mxu0 %v505
        %547 = vmatprep.subr.mxu0 %v504
        %548 = vmatpush1.msra.mxu0 %v503
        %549 = vmatprep.subr.mxu0 %v502
        %550 = vmatpush1.msra.mxu0 %v501
        %551 = vmatprep.subr.mxu0 %v500
        %552 = vmatpush1.msra.mxu0 %v499
        %553 = vmatprep.subr.mxu0 0.0
        %554 = vmatpush2.msra.mxu0 0.0
        %555 = vmatprep.subr.mxu0 0.0
        %556 = vmatpush2.msra.mxu0 0.0
        %557 = vmatprep.subr.mxu0 0.0
        %558 = vmatpush2.msra.mxu0 0.0
        %559 = vmatprep.subr.mxu0 0.0
        %560 = vmatpush2.msra.mxu0 0.0
        %561 = vmatprep.subr.mxu0 0.0
        %562 = vmatpush2.msra.mxu0 0.0
        %563 = vmatprep.subr.mxu0 0.0
        %564 = vmatpush2.msra.mxu0 0.0
        %565 = vmatprep.subr.mxu0 0.0
        %566 = vmatpush2.msra.mxu0 0.0
        %567 = vmatprep.subr.mxu0 0.0
        %568 = vmatpush2.msra.mxu0 0.0
        %569 = vmatprep.subr.mxu0 0.0
        %570 = vmatpush2.msra.mxu0 0.0
        %571 = vmatprep.subr.mxu0 0.0
        %572 = vmatpush2.msra.mxu0 0.0
        %573 = vmatprep.subr.mxu0 0.0
        %574 = vmatpush2.msra.mxu0 0.0
        %575 = vmatprep.subr.mxu0 0.0
        %576 = vmatpush2.msra.mxu0 0.0
        %577 = vmatprep.subr.mxu0 0.0
        %578 = vmatpush2.msra.mxu0 0.0
        %579 = vmatprep.subr.mxu0 0.0
        %580 = vmatpush2.msra.mxu0 0.0
        %581 = vmatprep.subr.mxu0 0.0
        %582 = vmatpush2.msra.mxu0 0.0
        %583 = vmatprep.subr.mxu0 0.0
        %584 = vmatpush2.msra.mxu0 0.0
        %585 = vmatprep.mubr.f32.mxu0 0.0
        %586 = vmatmul.mubr.f32.gmra.mxu0 %v519
        %v587 = vpop.f32.mrf.mxu0
        %v588 = vadd.f32 0.0, %v587
        %v589 = vpop.f32.mrf.mxu0
        %v590 = vadd.f32 0.0, %v589
        %591 = vdwg.mxu0
        %v592 = vmax.f32 %v588, 0.0
        %v593 = vmax.f32 %v590, 0.0
        %594 = vrot.lane.b32.xlu0 %v592, 17
        %v595 = vpop.permute.xlu0 %594
        %596 = vrot.lane.b32.xlu0 %v593, 17
        %v597 = vpop.permute.xlu0 %596
        %v598 = vsel %vm309, %v595, %v597
        %v599 = vsel %vm309, %v597, %v595
        %v600 = vsel %vm321, %v599, 0.0
        %v601 = vsel %vm322, %v598, 0.0
        %602 = vst [vmem:[#allocation3] sm:$0xff] %v600
        %603 = vst [vmem:[#allocation3 + $0x8] sm:$0xff] %v601
        %604 = vrot.lane.b32.xlu0 %v592, 16
        %v605 = vpop.permute.xlu0 %604
        %606 = vrot.lane.b32.xlu0 %v593, 16
        %v607 = vpop.permute.xlu0 %606
        %v608 = vsel %vm331, %v605, %v607
        %v609 = vsel %vm331, %v607, %v605
        %v610 = vsel %vm343, %v609, 0.0
        %v611 = vsel %vm344, %v608, 0.0
        %612 = vst [vmem:[#allocation3 + $0x10] sm:$0xff] %v610
        %613 = vst [vmem:[#allocation3 + $0x18] sm:$0xff] %v611
        %614 = vrot.lane.b32.xlu0 %v592, 15
        %v615 = vpop.permute.xlu0 %614
        %616 = vrot.lane.b32.xlu0 %v593, 15
        %v617 = vpop.permute.xlu0 %616
        %v618 = vsel %vm353, %v615, %v617
        %v619 = vsel %vm353, %v617, %v615
        %v620 = vsel %vm365, %v619, 0.0
        %v621 = vsel %vm366, %v618, 0.0
        %622 = vst [vmem:[#allocation3 + $0x20] sm:$0xff] %v620
        %623 = vst [vmem:[#allocation3 + $0x28] sm:$0xff] %v621
        %624 = vrot.lane.b32.xlu0 %v592, 1
        %v625 = vpop.permute.xlu0 %624
        %626 = vrot.lane.b32.xlu0 %v593, 1
        %v627 = vpop.permute.xlu0 %626
        %v628 = vsel %vm375, %v625, %v627
        %v629 = vsel %vm375, %v627, %v625
        %v630 = vsel %vm387, %v629, 0.0
        %v631 = vsel %vm388, %v628, 0.0
        %632 = vst [vmem:[#allocation3 + $0x30] sm:$0xff] %v630
        %633 = vst [vmem:[#allocation3 + $0x38] sm:$0xff] %v631
        %v634 = vsel %vm402, %v592, 0.0
        %v635 = vsel %vm403, %v593, 0.0
        %636 = vst [vmem:[#allocation3 + $0x40] sm:$0xff] %v634
        %637 = vst [vmem:[#allocation3 + $0x48] sm:$0xff] %v635
        %638 = vrot.lane.b32.xlu0 %v592, 127
        %v639 = vpop.permute.xlu0 %638
        %640 = vrot.lane.b32.xlu0 %v593, 127
        %v641 = vpop.permute.xlu0 %640
        %v642 = vsel %vm412, %v639, %v641
        %v643 = vsel %vm412, %v641, %v639
        %v644 = vsel %vm424, %v642, 0.0
        %v645 = vsel %vm425, %v643, 0.0
        %646 = vst [vmem:[#allocation3 + $0x50] sm:$0xff] %v644
        %647 = vst [vmem:[#allocation3 + $0x58] sm:$0xff] %v645
        %648 = vrot.lane.b32.xlu0 %v592, 113
        %v649 = vpop.permute.xlu0 %648
        %650 = vrot.lane.b32.xlu0 %v593, 113
        %v651 = vpop.permute.xlu0 %650
        %v652 = vsel %vm434, %v649, %v651
        %v653 = vsel %vm434, %v651, %v649
        %v654 = vsel %vm446, %v652, 0.0
        %v655 = vsel %vm447, %v653, 0.0
        %656 = vst [vmem:[#allocation3 + $0x60] sm:$0xff] %v654
        %657 = vst [vmem:[#allocation3 + $0x68] sm:$0xff] %v655
        %658 = vrot.lane.b32.xlu0 %v592, 112
        %v659 = vpop.permute.xlu0 %658
        %660 = vrot.lane.b32.xlu0 %v593, 112
        %v661 = vpop.permute.xlu0 %660
        %v662 = vsel %vm456, %v659, %v661
        %v663 = vsel %vm456, %v661, %v659
        %v664 = vsel %vm468, %v662, 0.0
        %v665 = vsel %vm469, %v663, 0.0
        %666 = vst [vmem:[#allocation3 + $0x70] sm:$0xff] %v664
        %667 = vst [vmem:[#allocation3 + $0x78] sm:$0xff] %v665
        %668 = vrot.lane.b32.xlu0 %v592, 111
        %v669 = vpop.permute.xlu0 %668
        %670 = vrot.lane.b32.xlu0 %v593, 111
        %v671 = vpop.permute.xlu0 %670
        %v672 = vsel %vm478, %v669, %v671
        %v673 = vsel %vm478, %v671, %v669
        %v674 = vsel %vm490, %v672, 0.0
        %v675 = vsel %vm491, %v673, 0.0
        %676 = vst [vmem:[#allocation3 + $0x80] sm:$0xff] %v674
        %677 = vst [vmem:[#allocation3 + $0x88] sm:$0xff] %v675
        %v678 = vld [vmem:[#allocation10] sm:$0xff]
        %v679 = vld [vmem:[#allocation3] sm:$0xff]
        %v680 = vld [vmem:[#allocation3 + $0x8] sm:$0xff]
        %v681 = vld [vmem:[#allocation3 + $0x10] sm:$0xff]
        %v682 = vld [vmem:[#allocation3 + $0x18] sm:$0xff]
        %v683 = vld [vmem:[#allocation3 + $0x20] sm:$0xff]
        %v684 = vld [vmem:[#allocation3 + $0x28] sm:$0xff]
        %v685 = vld [vmem:[#allocation3 + $0x30] sm:$0xff]
        %v686 = vld [vmem:[#allocation3 + $0x38] sm:$0xff]
        %v687 = vld [vmem:[#allocation3 + $0x40] sm:$0xff]
        %v688 = vld [vmem:[#allocation3 + $0x48] sm:$0xff]
        %v689 = vld [vmem:[#allocation3 + $0x50] sm:$0xff]
        %v690 = vld [vmem:[#allocation3 + $0x58] sm:$0xff]
        %v691 = vld [vmem:[#allocation3 + $0x60] sm:$0xff]
        %v692 = vld [vmem:[#allocation3 + $0x68] sm:$0xff]
        %v693 = vld [vmem:[#allocation3 + $0x70] sm:$0xff]
        %v694 = vld [vmem:[#allocation3 + $0x78] sm:$0xff]
        %v695 = vld [vmem:[#allocation3 + $0x80] sm:$0xff]
        %v696 = vld [vmem:[#allocation3 + $0x88] sm:$0xff]
        %v697 = vld [vmem:[#allocation3 + $0x90] sm:$0xff]
        %v698 = vld [vmem:[#allocation3 + $0x98] sm:$0xff]
        %vm699 = vcmask 654336
        %v701 = vsel %vm699, %v678, 0
        %703 = vmatprep.subr.mxu0 0.0
        %704 = vmatpush1.msra.mxu0 0.0
        %705 = vmatprep.subr.mxu0 0.0
        %706 = vmatpush1.msra.mxu0 0.0
        %707 = vmatprep.subr.mxu0 0.0
        %708 = vmatpush1.msra.mxu0 0.0
        %709 = vmatprep.subr.mxu0 0.0
        %710 = vmatpush1.msra.mxu0 0.0
        %711 = vmatprep.subr.mxu0 0.0
        %712 = vmatpush1.msra.mxu0 0.0
        %713 = vmatprep.subr.mxu0 0.0
        %714 = vmatpush1.msra.mxu0 0.0
        %715 = vmatprep.subr.mxu0 %v698
        %716 = vmatpush1.msra.mxu0 %v697
        %717 = vmatprep.subr.mxu0 %v696
        %718 = vmatpush1.msra.mxu0 %v695
        %719 = vmatprep.subr.mxu0 %v694
        %720 = vmatpush1.msra.mxu0 %v693
        %721 = vmatprep.subr.mxu0 %v692
        %722 = vmatpush1.msra.mxu0 %v691
        %723 = vmatprep.subr.mxu0 %v690
        %724 = vmatpush1.msra.mxu0 %v689
        %725 = vmatprep.subr.mxu0 %v688
        %726 = vmatpush1.msra.mxu0 %v687
        %727 = vmatprep.subr.mxu0 %v686
        %728 = vmatpush1.msra.mxu0 %v685
        %729 = vmatprep.subr.mxu0 %v684
        %730 = vmatpush1.msra.mxu0 %v683
        %731 = vmatprep.subr.mxu0 %v682
        %732 = vmatpush1.msra.mxu0 %v681
        %733 = vmatprep.subr.mxu0 %v680
        %734 = vmatpush1.msra.mxu0 %v679
        %735 = vmatprep.subr.mxu0 0.0
        %736 = vmatpush2.msra.mxu0 0.0
        %737 = vmatprep.subr.mxu0 0.0
        %738 = vmatpush2.msra.mxu0 0.0
        %739 = vmatprep.subr.mxu0 0.0
        %740 = vmatpush2.msra.mxu0 0.0
        %741 = vmatprep.subr.mxu0 0.0
        %742 = vmatpush2.msra.mxu0 0.0
        %743 = vmatprep.subr.mxu0 0.0
        %744 = vmatpush2.msra.mxu0 0.0
        %745 = vmatprep.subr.mxu0 0.0
        %746 = vmatpush2.msra.mxu0 0.0
        %747 = vmatprep.subr.mxu0 0.0
        %748 = vmatpush2.msra.mxu0 0.0
        %749 = vmatprep.subr.mxu0 0.0
        %750 = vmatpush2.msra.mxu0 0.0
        %751 = vmatprep.subr.mxu0 0.0
        %752 = vmatpush2.msra.mxu0 0.0
        %753 = vmatprep.subr.mxu0 0.0
        %754 = vmatpush2.msra.mxu0 0.0
        %755 = vmatprep.subr.mxu0 0.0
        %756 = vmatpush2.msra.mxu0 0.0
        %757 = vmatprep.subr.mxu0 0.0
        %758 = vmatpush2.msra.mxu0 0.0
        %759 = vmatprep.subr.mxu0 0.0
        %760 = vmatpush2.msra.mxu0 0.0
        %761 = vmatprep.subr.mxu0 0.0
        %762 = vmatpush2.msra.mxu0 0.0
        %763 = vmatprep.subr.mxu0 0.0
        %764 = vmatpush2.msra.mxu0 0.0
        %765 = vmatprep.subr.mxu0 0.0
        %766 = vmatpush2.msra.mxu0 0.0
        %767 = vmatprep.mubr.f32.mxu0 0.0
        %768 = vmatmul.mubr.f32.gmra.mxu0 %v701
        %v769 = vpop.f32.mrf.mxu0
        %v770 = vadd.f32 0.0, %v769
        %v771 = vpop.f32.mrf.mxu0
        %v772 = vadd.f32 0.0, %v771
        %773 = vdwg.mxu0
        %v774 = vmax.f32 %v770, 0.0
        %v775 = vmax.f32 %v772, 0.0
        %776 = vst [vmem:[%s251] sm:$0xff] %v774
        %777 = vst [vmem:[%s251 + $0x8] sm:$0xff] %v775
        %s778 = sand.u32 %s120, 1
        %s779 = scalar_lea.sflag [#allocation6], %s778
        %s780 = sand.u32 %s120, 1
        %s781 = smul.addr %s780, 16
        %s782 = scalar_lea.vmem [#allocation12], %s781
        // Predicated region
        $region53: #{tpu_custom_call.1} parent=35 // pred_check
          %p783 = pneg %p130
        $region54: #{tpu_custom_call.1} parent=35 // pred_check_branch
          %785 = sbr.rel (%p783) target = $region56
        $region55: #{tpu_custom_call.1} parent=35 // pred_region
          %s787 = ssub.s32 256, 256
          %788 = vsyncadd %s779, %s787
          %s789 = smul.addr %s23, 2
          %s790 = smul.addr %s789, 128
          %s791 = scalar_lea.hbm %s4, %s790
          %s793 = sshll.u32 %s782, 4
          %s794 = int_to_ptr.vmem [resolvable:$true] %s793
          %796 = dma.vmem_to_hbm [thread:$0]  %s794, 256, %s791, %s779
        $region56: #{tpu_custom_call.1} parent=35 // pred_fallthru
          _
      $region36: #{tpu_custom_call.1} parent=5 // pred_fallthru
        _
      %p797 = scmp.le.s32.totalorder 2, %s18
      // Predicated region
      $region57: #{tpu_custom_call.1} parent=5 // pred_check
        %p798 = pneg %p797
      $region58: #{tpu_custom_call.1} parent=5 // pred_check_branch
        %800 = sbr.rel (%p798) target = $region60
      $region59: #{tpu_custom_call.1} parent=5 // pred_region
        %s801 = ssub.s32 %s18, 2
        // Predicated region
        $region61: #{tpu_custom_call.1} parent=59 // pred_check
          %p802 = pneg %p136
        $region62: #{tpu_custom_call.1} parent=59 // pred_check_branch
          %804 = sbr.rel (%p802) target = $region64
        $region63: #{tpu_custom_call.1} parent=59 // pred_region
          %s805 = sand.u32 %s121, 1
          %s806 = scalar_lea.sflag [#allocation6], %s805
          %s807 = sand.u32 %s121, 1
          %s808 = smul.addr %s807, 16
          %s809 = scalar_lea.vmem [#allocation12], %s808
          %810 = dma.done %s806, 256
        $region64: #{tpu_custom_call.1} parent=59 // pred_fallthru
          _
      $region60: #{tpu_custom_call.1} parent=5 // pred_fallthru
        _
    $region6: #{tpu_custom_call.1} parent=1 // loop_footer
      %s22 = sadd.s32 1, %s18
    $region7: #{tpu_custom_call.1} parent=1 // loop_footer_branch
      %17 = sbr.rel target = $region3
    $region8: #{tpu_custom_call.1} parent=1 // loop_exit
      _
    %811 = vsyncpa [#allocation5], 1
    %s812 = scalar_lea.sflag [#allocation5], 1
    %813 = vsyncpa %s812, 1
    %814 = vsyncpa [#allocation8], 1
    %s815 = scalar_lea.sflag [#allocation8], 1
    %816 = vsyncpa %s815, 1
    %817 = vsyncpa [#allocation11], 1
    %818 = vsyncpa [#allocation6], 1
    %s819 = scalar_lea.sflag [#allocation6], 1
    %820 = vsyncpa %s819, 1

</llo_original>
